<compile_context>
chip_gen: v7x
topology: tpu7x:2x2x1
jax: 0.10.0
libtpu: 0.0.40
codegen_flags: <defaults>
</compile_context>

<pallas_src>
import jax
import jax.numpy as jnp
from jax import lax
from jax.experimental import pallas as pl
from jax.experimental.pallas import tpu as pltpu


_VMEM_SPEC = pl.BlockSpec(memory_space=pltpu.MemorySpace.VMEM)
_SMEM_SPEC = pl.BlockSpec(memory_space=pltpu.MemorySpace.SMEM)


# ----------------------------- Pallas kernel -------------------------------- #

def make_fused_kernel(num_layers, T, B, H, V):
    """Fused embedding-lookup + interleaved LSTM stack + FC head.

    B is the per-grid-step batch tile.  Ref order:
      idx(SMEM), E0, b0, Whh0, [Wih_l, b_l, Whh_l for l>=1], fc_w, fc_b, out.
    """

    def kernel(*refs):
        idx_ref = refs[0]                       # (B_total*T,) int32 in SMEM
        e0_ref, b0_ref, whh0_ref = refs[1:4]
        rest = refs[4:]
        n_rest = 3 * (num_layers - 1)
        layer_refs = rest[:n_rest]
        fcw_ref = rest[n_rest]
        fcb_ref = rest[n_rest + 1]
        out_ref = rest[n_rest + 2]

        # ---- hoist all weights (a few vregs each) into values ----
        e0 = e0_ref[...]                        # (V, 4H) bf16  (embedding @ Wih0)
        b0 = b0_ref[...]                        # (1, 4H) f32
        whh = [whh0_ref[...]]                   # (H, 4H) bf16 per layer
        wih, bias = [], []
        for l in range(num_layers - 1):
            w_r, b_r, u_r = layer_refs[3 * l: 3 * l + 3]
            wih.append(w_r[...])                # (H, 4H) bf16
            bias.append(b_r[...])               # (1, 4H) f32
            whh.append(u_r[...])

        col_iota = lax.broadcasted_iota(jnp.int32, (B, V), 1)
        row_iota = lax.broadcasted_iota(jnp.int32, (B, V), 0)

        # first flat-id row of this batch tile (ids are (b, t) row-major)
        row0 = pl.program_id(0) * B * T

        def lstm_cell(pre, h_b, c_f, u):
            # pre: (B,4H) f32 input pre-activation (bias already folded in)
            gates = pre + jnp.dot(h_b, u, preferred_element_type=jnp.float32)
            sig = jax.nn.sigmoid(gates)          # 1 EUP push, full (B,4H) vreg
            th = jnp.tanh(gates)                 # 1 EUP push
            c_new = sig[:, H:2 * H] * c_f + sig[:, :H] * th[:, 2 * H:3 * H]
            # h is only ever an MXU operand -> cast to bf16 once, here.
            h_new = (sig[:, 3 * H:] * jnp.tanh(c_new)).astype(jnp.bfloat16)
            return h_new, c_new

        h = [jnp.zeros((B, H), jnp.bfloat16) for _ in range(num_layers)]
        c = [jnp.zeros((B, H), jnp.float32) for _ in range(num_layers)]

        for t in range(T):                       # static unroll: T small & fixed
            # layer-0 pre-activation: one-hot row-select of E0 on the MXU.
            # ids come from SMEM scalars; OOB ids silently select a zero row
            # (nn.Embedding would raise) -- wrapper documents this.
            tgt = idx_ref[row0 + t]
            for b in range(1, B):
                tgt = jnp.where(row_iota == b, idx_ref[row0 + b * T + t], tgt)
            onehot = (col_iota == tgt).astype(jnp.bfloat16)          # (B, V)
            pre = jnp.dot(onehot, e0, preferred_element_type=jnp.float32) + b0

            # interleaved layer stack: layer l step t runs as soon as
            # layer l-1 step t's h exists.
            h[0], c[0] = lstm_cell(pre, h[0], c[0], whh[0])
            for l in range(1, num_layers):
                pre = (jnp.dot(h[l - 1], wih[l - 1],
                               preferred_element_type=jnp.float32)
                       + bias[l - 1])                                # (B, 4H)
                h[l], c[l] = lstm_cell(pre, h[l], c[l], whh[l])

        # FC head on the last step's hidden state; lane-dense padded output
        # block -> single unmasked store.
        out_ref[...] = (jnp.dot(h[-1], fcw_ref[...],
                                preferred_element_type=jnp.float32)
                        + fcb_ref[...])

    return kernel


# ------------------------------ JAX wrapper --------------------------------- #

def prep_kernel_params(params, lane=128):
    """One-time weight prep: fold embedding into Wih0, cast MXU operands to
    bf16, pad the FC head to a lane-dense width.  Do this once and reuse."""
    layers = params["layers"]
    V = params["embedding"].shape[0]
    v_pad = ((V + lane - 1) // lane) * lane
    return {
        "e0": (params["embedding"] @ layers[0]["wih_t"]).astype(jnp.bfloat16),
        "b0": layers[0]["b"],
        "whh": [l["whh_t"].astype(jnp.bfloat16) for l in layers],
        "wih_rest": [l["wih_t"].astype(jnp.bfloat16) for l in layers[1:]],
        "b_rest": [l["b"] for l in layers[1:]],
        "fc_w_pad": jnp.pad(params["fc_w_t"],
                            ((0, 0), (0, v_pad - V))).astype(jnp.bfloat16),
        "fc_b_pad": jnp.pad(params["fc_b"], ((0, 0), (0, v_pad - V))),
    }


def next_syllable_lstm_forward(x_idx, kp, batch_tile=None):
    """x_idx: (B, T) int32 syllable ids (must be in [0, vocab_size)).
    Returns logits (B, vocab_size) f32.  Intended to be wrapped in jax.jit
    once and reused so launch / trace overhead is amortized across calls."""
    B, T = x_idx.shape
    V, four_h = kp["e0"].shape
    H = four_h // 4
    Vp = kp["fc_w_pad"].shape[1]
    num_layers = len(kp["whh"])

    # Tiny batches: grid=(1,), no overhead.  Larger batches: parallel batch
    # tiles so v7x's two TensorCores (and megacore scheduling) both get work.
    if batch_tile is None:
        batch_tile = 8 if (B >= 16 and B % 8 == 0) else B
    assert B % batch_tile == 0
    n_tiles = B // batch_tile

    ids = x_idx.reshape(B * T).astype(jnp.int32)     # (b, t) row-major flatten

    inputs = [ids, kp["e0"], kp["b0"], kp["whh"][0]]
    for l in range(1, num_layers):
        inputs += [kp["wih_rest"][l - 1], kp["b_rest"][l - 1], kp["whh"][l]]
    inputs += [kp["fc_w_pad"], kp["fc_b_pad"]]

    in_specs = [_SMEM_SPEC] + [_VMEM_SPEC] * (len(inputs) - 1)

    out_pad = pl.pallas_call(
        make_fused_kernel(num_layers, T, batch_tile, H, V),
        grid=(n_tiles,),
        out_shape=jax.ShapeDtypeStruct((B, Vp), jnp.float32),
        in_specs=in_specs,
        out_specs=pl.BlockSpec((batch_tile, Vp), lambda i: (i, 0)),
        compiler_params=pltpu.CompilerParams(
            dimension_semantics=("parallel",)),
    )(*inputs)
    return out_pad[:, :V]


# ------------------------- deterministic parameters ------------------------- #

def init_params(key, vocab_size, embedding_dim, hidden_dim, num_layers):
    keys = jax.random.split(key, 1 + 4 * num_layers + 2)
    k = iter(keys)
    bound = 1.0 / (hidden_dim ** 0.5)

    params = {
        # nn.Embedding default init: N(0, 1)
        "embedding": jax.random.normal(next(k), (vocab_size, embedding_dim),
                                       jnp.float32),
        "layers": [],
    }
    in_dim = embedding_dim
    for _ in range(num_layers):
        wih = jax.random.uniform(next(k), (4 * hidden_dim, in_dim),
                                 jnp.float32, -bound, bound)
        whh = jax.random.uniform(next(k), (4 * hidden_dim, hidden_dim),
                                 jnp.float32, -bound, bound)
        bih = jax.random.uniform(next(k), (4 * hidden_dim,),
                                 jnp.float32, -bound, bound)
        bhh = jax.random.uniform(next(k), (4 * hidden_dim,),
                                 jnp.float32, -bound, bound)
        params["layers"].append({
            "wih_t": wih.T,                       # (in_dim, 4H)
            "whh_t": whh.T,                       # (H, 4H)
            "b": (bih + bhh)[None, :],            # (1, 4H)  b_ih + b_hh fused
        })
        in_dim = hidden_dim

    fc_w = jax.random.uniform(next(k), (vocab_size, hidden_dim),
                              jnp.float32, -bound, bound)
    fc_b = jax.random.uniform(next(k), (vocab_size,),
                              jnp.float32, -bound, bound)
    params["fc_w_t"] = fc_w.T                     # (H, V)
    params["fc_b"] = fc_b[None, :]                # (1, V)
    return params


# ------------------------------ references ---------------------------------- #

def reference_forward(x_idx, params):
    """Full-f32 PyTorch-semantics reference (embedding gather, LSTM, FC)."""
    emb = jnp.take(params["embedding"], x_idx, axis=0)      # (B, T, E)
    B, T, _ = emb.shape
    x_seq = emb
    for layer in params["layers"]:
        H = layer["whh_t"].shape[0]
        h = jnp.zeros((B, H), jnp.float32)
        c = jnp.zeros((B, H), jnp.float32)
        outs = []
        for t in range(T):
            gates = (x_seq[:, t, :] @ layer["wih_t"]
                     + h @ layer["whh_t"] + layer["b"])
            i_g = jax.nn.sigmoid(gates[:, 0 * H:1 * H])
            f_g = jax.nn.sigmoid(gates[:, 1 * H:2 * H])
            g_g = jnp.tanh(gates[:, 2 * H:3 * H])
            o_g = jax.nn.sigmoid(gates[:, 3 * H:4 * H])
            c = f_g * c + i_g * g_g
            h = o_g * jnp.tanh(c)
            outs.append(h)
        x_seq = jnp.stack(outs, axis=1)
    return x_seq[:, -1, :] @ params["fc_w_t"] + params["fc_b"]


def kernel_math_reference(x_idx, params, kp):
    """Pure-JAX replica of the kernel's exact math (bf16 MXU operands, f32
    accumulation / elementwise) for a tight correctness check."""
    B, T = x_idx.shape
    H = params["layers"][0]["whh_t"].shape[0]
    L = len(params["layers"])
    V = params["embedding"].shape[0]

    # one-hot @ E0(bf16) with a single nonzero term == exact row gather
    x0 = jnp.take(kp["e0"].astype(jnp.float32), x_idx, axis=0) + kp["b0"]

    def cell(pre, h_b, c_f, u_b):
        gates = pre + jnp.dot(h_b, u_b, preferred_element_type=jnp.float32)
        sig = jax.nn.sigmoid(gates)
        th = jnp.tanh(gates)
        c_new = sig[:, H:2 * H] * c_f + sig[:, :H] * th[:, 2 * H:3 * H]
        h_new = (sig[:, 3 * H:] * jnp.tanh(c_new)).astype(jnp.bfloat16)
        return h_new, c_new

    h = [jnp.zeros((B, H), jnp.bfloat16) for _ in range(L)]
    c = [jnp.zeros((B, H), jnp.float32) for _ in range(L)]
    for t in range(T):
        h[0], c[0] = cell(x0[:, t], h[0], c[0], kp["whh"][0])
        for l in range(1, L):
            pre = (jnp.dot(h[l - 1], kp["wih_rest"][l - 1],
                           preferred_element_type=jnp.float32)
                   + kp["b_rest"][l - 1])
            h[l], c[l] = cell(pre, h[l], c[l], kp["whh"][l])

    logits_pad = (jnp.dot(h[-1], kp["fc_w_pad"],
                          preferred_element_type=jnp.float32)
                  + kp["fc_b_pad"])
    return logits_pad[:, :V]


# ---------------------------------- main ------------------------------------ #

if __name__ == "__main__":
    vocab_size = 48
    embedding_dim = 16
    hidden_dim = 32          # 4H = 128 -> gates are exactly one lane-width
    num_layers = 2
    batch = 2
    seq_len = 8

    root = jax.random.PRNGKey(0)
    k_params, k_data = jax.random.split(root)

    params = init_params(k_params, vocab_size, embedding_dim, hidden_dim,
                         num_layers)
    kparams = prep_kernel_params(params)          # one-time weight fold/cast/pad

    # NOTE: ids must lie in [0, vocab_size); the folded one-hot lookup maps
    # out-of-range ids to a zero embedding row instead of raising like
    # nn.Embedding.  Inputs here are generated in-range by construction.
    x_idx = jax.random.randint(k_data, (batch, seq_len), 0, vocab_size,
                               dtype=jnp.int32)

    fwd = jax.jit(next_syllable_lstm_forward)     # cache trace/launch overhead
    logits = jax.block_until_ready(fwd(x_idx, kparams))
    assert logits.shape == (batch, vocab_size)

    # Tight check against the kernel's exact (bf16-MXU, f32-accumulate) math:
    # catches gate-ordering / bias-fusion / layout bugs.
    exact = jax.block_until_ready(kernel_math_reference(x_idx, params, kparams))
    err_exact = float(jnp.max(jnp.abs(logits - exact)))
    assert err_exact < 2e-4, f"kernel-math mismatch: {err_exact}"

    # Sanity check against the full-f32 PyTorch-semantics reference; the gap
    # is purely the bf16 MXU-operand quantization.
    ref = jax.block_until_ready(reference_forward(x_idx, params))
    err_f32 = float(jnp.max(jnp.abs(logits - ref)))
    assert err_f32 < 5e-2, f"f32 reference mismatch: {err_f32}"

    print("KERNEL_OK")
</pallas_src>

<mosaic_0001>
module attributes {stable_mosaic.version = 11 : i64} {
  func.func @kernel(%arg0: i32, %arg1: memref<16xi32, #tpu.memory_space<smem>>, %arg2: memref<48x128xbf16, #tpu.memory_space<vmem>>, %arg3: memref<1x128xf32, #tpu.memory_space<vmem>>, %arg4: memref<32x128xbf16, #tpu.memory_space<vmem>>, %arg5: memref<32x128xbf16, #tpu.memory_space<vmem>>, %arg6: memref<1x128xf32, #tpu.memory_space<vmem>>, %arg7: memref<32x128xbf16, #tpu.memory_space<vmem>>, %arg8: memref<32x128xbf16, #tpu.memory_space<vmem>>, %arg9: memref<1x128xf32, #tpu.memory_space<vmem>>, %arg10: memref<2x128xf32, #tpu.memory_space<vmem>>) attributes {dimension_semantics = [#tpu.dimension_semantics<parallel>], iteration_bounds = array<i64: 1>, scalar_prefetch = 0 : i64, scratch_operands = 0 : i64, tpu.core_type = #tpu.core_type<tc>, window_params = [{transform_indices = @transform_0, window_bounds = array<i64: 16>}, {pipeline_mode = #tpu.pipeline_mode<synchronous>, transform_indices = @transform_1, window_bounds = array<i64: 48, 128>}, {pipeline_mode = #tpu.pipeline_mode<synchronous>, transform_indices = @transform_2, window_bounds = array<i64: 1, 128>}, {pipeline_mode = #tpu.pipeline_mode<synchronous>, transform_indices = @transform_3, window_bounds = array<i64: 32, 128>}, {pipeline_mode = #tpu.pipeline_mode<synchronous>, transform_indices = @transform_4, window_bounds = array<i64: 32, 128>}, {pipeline_mode = #tpu.pipeline_mode<synchronous>, transform_indices = @transform_5, window_bounds = array<i64: 1, 128>}, {pipeline_mode = #tpu.pipeline_mode<synchronous>, transform_indices = @transform_6, window_bounds = array<i64: 32, 128>}, {pipeline_mode = #tpu.pipeline_mode<synchronous>, transform_indices = @transform_7, window_bounds = array<i64: 32, 128>}, {pipeline_mode = #tpu.pipeline_mode<synchronous>, transform_indices = @transform_8, window_bounds = array<i64: 1, 128>}, {transform_indices = @transform_9, window_bounds = array<i64: 2, 128>}]} {
    %c0 = arith.constant 0 : index
    %c0_0 = arith.constant 0 : index
    %0 = vector.load %arg2[%c0, %c0_0] : memref<48x128xbf16, #tpu.memory_space<vmem>>, vector<48x128xbf16>
    %c0_1 = arith.constant 0 : index
    %c0_2 = arith.constant 0 : index
    %1 = vector.load %arg3[%c0_1, %c0_2] : memref<1x128xf32, #tpu.memory_space<vmem>>, vector<1x128xf32>
    %c0_3 = arith.constant 0 : index
    %c0_4 = arith.constant 0 : index
    %2 = vector.load %arg4[%c0_3, %c0_4] : memref<32x128xbf16, #tpu.memory_space<vmem>>, vector<32x128xbf16>
    %c0_5 = arith.constant 0 : index
    %c0_6 = arith.constant 0 : index
    %3 = vector.load %arg5[%c0_5, %c0_6] : memref<32x128xbf16, #tpu.memory_space<vmem>>, vector<32x128xbf16>
    %c0_7 = arith.constant 0 : index
    %c0_8 = arith.constant 0 : index
    %4 = vector.load %arg6[%c0_7, %c0_8] : memref<1x128xf32, #tpu.memory_space<vmem>>, vector<1x128xf32>
    %c0_9 = arith.constant 0 : index
    %c0_10 = arith.constant 0 : index
    %5 = vector.load %arg7[%c0_9, %c0_10] : memref<32x128xbf16, #tpu.memory_space<vmem>>, vector<32x128xbf16>
    %6 = tpu.iota {dimensions = array<i32: 1>} : vector<2x48xi32>
    %7 = tpu.iota {dimensions = array<i32: 0>} : vector<2x48xi32>
    %c2_i32 = arith.constant 2 : i32
    %8 = arith.muli %arg0, %c2_i32 : i32
    %c8_i32 = arith.constant 8 : i32
    %9 = arith.muli %8, %c8_i32 : i32
    %cst = arith.constant 0.000000e+00 : bf16
    %10 = vector.broadcast %cst : bf16 to vector<2x32xbf16>
    %cst_11 = arith.constant 0.000000e+00 : bf16
    %11 = vector.broadcast %cst_11 : bf16 to vector<2x32xbf16>
    %cst_12 = arith.constant 0.000000e+00 : f32
    %12 = vector.broadcast %cst_12 : f32 to vector<2x32xf32>
    %cst_13 = arith.constant 0.000000e+00 : f32
    %13 = vector.broadcast %cst_13 : f32 to vector<2x32xf32>
    %c0_i32 = arith.constant 0 : i32
    %14 = arith.addi %9, %c0_i32 : i32
    %15 = arith.index_cast %14 : i32 to index
    %16 = memref.load %arg1[%15] : memref<16xi32, #tpu.memory_space<smem>>
    %c1_i32 = arith.constant 1 : i32
    %17 = vector.broadcast %c1_i32 : i32 to vector<2x48xi32>
    %18 = arith.cmpi eq, %7, %17 : vector<2x48xi32>
    %c8_i32_14 = arith.constant 8 : i32
    %19 = arith.addi %9, %c8_i32_14 : i32
    %c0_i32_15 = arith.constant 0 : i32
    %20 = arith.addi %19, %c0_i32_15 : i32
    %21 = arith.index_cast %20 : i32 to index
    %22 = memref.load %arg1[%21] : memref<16xi32, #tpu.memory_space<smem>>
    %23 = vector.broadcast %22 : i32 to vector<2x48xi32>
    %24 = vector.broadcast %16 : i32 to vector<2x48xi32>
    %25 = arith.select %18, %23, %24 : vector<2x48xi1>, vector<2x48xi32>
    %26 = arith.cmpi eq, %6, %25 : vector<2x48xi32>
    %27 = arith.extui %26 : vector<2x48xi1> to vector<2x48xi32>
    %28 = arith.sitofp %27 : vector<2x48xi32> to vector<2x48xf32>
    %29 = arith.truncf %28 : vector<2x48xf32> to vector<2x48xbf16>
    %cst_16 = arith.constant dense<0.000000e+00> : vector<2x128xf32>
    %30 = tpu.matmul %29, %0, %cst_16 {dimension_numbers = #tpu.dot_dimension_numbers<[1], [0], [0], [1], [0, 0, 1, 1], [], []>} : vector<2x48xbf16>, vector<48x128xbf16>, vector<2x128xf32> -> vector<2x128xf32>
    %31 = vector.broadcast %1 : vector<1x128xf32> to vector<2x128xf32>
    %32 = arith.addf %30, %31 : vector<2x128xf32>
    %cst_17 = arith.constant dense<0.000000e+00> : vector<2x128xf32>
    %33 = tpu.matmul %10, %2, %cst_17 {dimension_numbers = #tpu.dot_dimension_numbers<[1], [0], [0], [1], [0, 0, 1, 1], [], []>} : vector<2x32xbf16>, vector<32x128xbf16>, vector<2x128xf32> -> vector<2x128xf32>
    %34 = arith.addf %32, %33 : vector<2x128xf32>
    %35 = arith.negf %34 : vector<2x128xf32>
    %36 = math.exp %35 : vector<2x128xf32>
    %cst_18 = arith.constant 1.000000e+00 : f32
    %37 = vector.broadcast %cst_18 : f32 to vector<2x128xf32>
    %38 = arith.addf %37, %36 : vector<2x128xf32>
    %39 = arith.divf %37, %38 : vector<2x128xf32>
    %40 = math.tanh %34 : vector<2x128xf32>
    %41 = vector.extract_strided_slice %39 {offsets = [0, 32], sizes = [2, 32], strides = [1, 1]} : vector<2x128xf32> to vector<2x32xf32>
    %42 = arith.mulf %41, %12 : vector<2x32xf32>
    %43 = vector.extract_strided_slice %39 {offsets = [0, 0], sizes = [2, 32], strides = [1, 1]} : vector<2x128xf32> to vector<2x32xf32>
    %44 = vector.extract_strided_slice %40 {offsets = [0, 64], sizes = [2, 32], strides = [1, 1]} : vector<2x128xf32> to vector<2x32xf32>
    %45 = arith.mulf %43, %44 : vector<2x32xf32>
    %46 = arith.addf %42, %45 : vector<2x32xf32>
    %47 = vector.extract_strided_slice %39 {offsets = [0, 96], sizes = [2, 32], strides = [1, 1]} : vector<2x128xf32> to vector<2x32xf32>
    %48 = math.tanh %46 : vector<2x32xf32>
    %49 = arith.mulf %47, %48 : vector<2x32xf32>
    %50 = arith.truncf %49 : vector<2x32xf32> to vector<2x32xbf16>
    %cst_19 = arith.constant dense<0.000000e+00> : vector<2x128xf32>
    %51 = tpu.matmul %50, %3, %cst_19 {dimension_numbers = #tpu.dot_dimension_numbers<[1], [0], [0], [1], [0, 0, 1, 1], [], []>} : vector<2x32xbf16>, vector<32x128xbf16>, vector<2x128xf32> -> vector<2x128xf32>
    %52 = vector.broadcast %4 : vector<1x128xf32> to vector<2x128xf32>
    %53 = arith.addf %51, %52 : vector<2x128xf32>
    %cst_20 = arith.constant dense<0.000000e+00> : vector<2x128xf32>
    %54 = tpu.matmul %11, %5, %cst_20 {dimension_numbers = #tpu.dot_dimension_numbers<[1], [0], [0], [1], [0, 0, 1, 1], [], []>} : vector<2x32xbf16>, vector<32x128xbf16>, vector<2x128xf32> -> vector<2x128xf32>
    %55 = arith.addf %53, %54 : vector<2x128xf32>
    %56 = arith.negf %55 : vector<2x128xf32>
    %57 = math.exp %56 : vector<2x128xf32>
    %cst_21 = arith.constant 1.000000e+00 : f32
    %58 = vector.broadcast %cst_21 : f32 to vector<2x128xf32>
    %59 = arith.addf %58, %57 : vector<2x128xf32>
    %60 = arith.divf %58, %59 : vector<2x128xf32>
    %61 = math.tanh %55 : vector<2x128xf32>
    %62 = vector.extract_strided_slice %60 {offsets = [0, 32], sizes = [2, 32], strides = [1, 1]} : vector<2x128xf32> to vector<2x32xf32>
    %63 = arith.mulf %62, %13 : vector<2x32xf32>
    %64 = vector.extract_strided_slice %60 {offsets = [0, 0], sizes = [2, 32], strides = [1, 1]} : vector<2x128xf32> to vector<2x32xf32>
    %65 = vector.extract_strided_slice %61 {offsets = [0, 64], sizes = [2, 32], strides = [1, 1]} : vector<2x128xf32> to vector<2x32xf32>
    %66 = arith.mulf %64, %65 : vector<2x32xf32>
    %67 = arith.addf %63, %66 : vector<2x32xf32>
    %68 = vector.extract_strided_slice %60 {offsets = [0, 96], sizes = [2, 32], strides = [1, 1]} : vector<2x128xf32> to vector<2x32xf32>
    %69 = math.tanh %67 : vector<2x32xf32>
    %70 = arith.mulf %68, %69 : vector<2x32xf32>
    %71 = arith.truncf %70 : vector<2x32xf32> to vector<2x32xbf16>
    %c1_i32_22 = arith.constant 1 : i32
    %72 = arith.addi %9, %c1_i32_22 : i32
    %73 = arith.index_cast %72 : i32 to index
    %74 = memref.load %arg1[%73] : memref<16xi32, #tpu.memory_space<smem>>
    %c1_i32_23 = arith.constant 1 : i32
    %75 = vector.broadcast %c1_i32_23 : i32 to vector<2x48xi32>
    %76 = arith.cmpi eq, %7, %75 : vector<2x48xi32>
    %c8_i32_24 = arith.constant 8 : i32
    %77 = arith.addi %9, %c8_i32_24 : i32
    %c1_i32_25 = arith.constant 1 : i32
    %78 = arith.addi %77, %c1_i32_25 : i32
    %79 = arith.index_cast %78 : i32 to index
    %80 = memref.load %arg1[%79] : memref<16xi32, #tpu.memory_space<smem>>
    %81 = vector.broadcast %80 : i32 to vector<2x48xi32>
    %82 = vector.broadcast %74 : i32 to vector<2x48xi32>
    %83 = arith.select %76, %81, %82 : vector<2x48xi1>, vector<2x48xi32>
    %84 = arith.cmpi eq, %6, %83 : vector<2x48xi32>
    %85 = arith.extui %84 : vector<2x48xi1> to vector<2x48xi32>
    %86 = arith.sitofp %85 : vector<2x48xi32> to vector<2x48xf32>
    %87 = arith.truncf %86 : vector<2x48xf32> to vector<2x48xbf16>
    %cst_26 = arith.constant dense<0.000000e+00> : vector<2x128xf32>
    %88 = tpu.matmul %87, %0, %cst_26 {dimension_numbers = #tpu.dot_dimension_numbers<[1], [0], [0], [1], [0, 0, 1, 1], [], []>} : vector<2x48xbf16>, vector<48x128xbf16>, vector<2x128xf32> -> vector<2x128xf32>
    %89 = vector.broadcast %1 : vector<1x128xf32> to vector<2x128xf32>
    %90 = arith.addf %88, %89 : vector<2x128xf32>
    %cst_27 = arith.constant dense<0.000000e+00> : vector<2x128xf32>
    %91 = tpu.matmul %50, %2, %cst_27 {dimension_numbers = #tpu.dot_dimension_numbers<[1], [0], [0], [1], [0, 0, 1, 1], [], []>} : vector<2x32xbf16>, vector<32x128xbf16>, vector<2x128xf32> -> vector<2x128xf32>
    %92 = arith.addf %90, %91 : vector<2x128xf32>
    %93 = arith.negf %92 : vector<2x128xf32>
    %94 = math.exp %93 : vector<2x128xf32>
    %cst_28 = arith.constant 1.000000e+00 : f32
    %95 = vector.broadcast %cst_28 : f32 to vector<2x128xf32>
    %96 = arith.addf %95, %94 : vector<2x128xf32>
    %97 = arith.divf %95, %96 : vector<2x128xf32>
    %98 = math.tanh %92 : vector<2x128xf32>
    %99 = vector.extract_strided_slice %97 {offsets = [0, 32], sizes = [2, 32], strides = [1, 1]} : vector<2x128xf32> to vector<2x32xf32>
    %100 = arith.mulf %99, %46 : vector<2x32xf32>
    %101 = vector.extract_strided_slice %97 {offsets = [0, 0], sizes = [2, 32], strides = [1, 1]} : vector<2x128xf32> to vector<2x32xf32>
    %102 = vector.extract_strided_slice %98 {offsets = [0, 64], sizes = [2, 32], strides = [1, 1]} : vector<2x128xf32> to vector<2x32xf32>
    %103 = arith.mulf %101, %102 : vector<2x32xf32>
    %104 = arith.addf %100, %103 : vector<2x32xf32>
    %105 = vector.extract_strided_slice %97 {offsets = [0, 96], sizes = [2, 32], strides = [1, 1]} : vector<2x128xf32> to vector<2x32xf32>
    %106 = math.tanh %104 : vector<2x32xf32>
    %107 = arith.mulf %105, %106 : vector<2x32xf32>
    %108 = arith.truncf %107 : vector<2x32xf32> to vector<2x32xbf16>
    %cst_29 = arith.constant dense<0.000000e+00> : vector<2x128xf32>
    %109 = tpu.matmul %108, %3, %cst_29 {dimension_numbers = #tpu.dot_dimension_numbers<[1], [0], [0], [1], [0, 0, 1, 1], [], []>} : vector<2x32xbf16>, vector<32x128xbf16>, vector<2x128xf32> -> vector<2x128xf32>
    %110 = vector.broadcast %4 : vector<1x128xf32> to vector<2x128xf32>
    %111 = arith.addf %109, %110 : vector<2x128xf32>
    %cst_30 = arith.constant dense<0.000000e+00> : vector<2x128xf32>
    %112 = tpu.matmul %71, %5, %cst_30 {dimension_numbers = #tpu.dot_dimension_numbers<[1], [0], [0], [1], [0, 0, 1, 1], [], []>} : vector<2x32xbf16>, vector<32x128xbf16>, vector<2x128xf32> -> vector<2x128xf32>
    %113 = arith.addf %111, %112 : vector<2x128xf32>
    %114 = arith.negf %113 : vector<2x128xf32>
    %115 = math.exp %114 : vector<2x128xf32>
    %cst_31 = arith.constant 1.000000e+00 : f32
    %116 = vector.broadcast %cst_31 : f32 to vector<2x128xf32>
    %117 = arith.addf %116, %115 : vector<2x128xf32>
    %118 = arith.divf %116, %117 : vector<2x128xf32>
    %119 = math.tanh %113 : vector<2x128xf32>
    %120 = vector.extract_strided_slice %118 {offsets = [0, 32], sizes = [2, 32], strides = [1, 1]} : vector<2x128xf32> to vector<2x32xf32>
    %121 = arith.mulf %120, %67 : vector<2x32xf32>
    %122 = vector.extract_strided_slice %118 {offsets = [0, 0], sizes = [2, 32], strides = [1, 1]} : vector<2x128xf32> to vector<2x32xf32>
    %123 = vector.extract_strided_slice %119 {offsets = [0, 64], sizes = [2, 32], strides = [1, 1]} : vector<2x128xf32> to vector<2x32xf32>
    %124 = arith.mulf %122, %123 : vector<2x32xf32>
    %125 = arith.addf %121, %124 : vector<2x32xf32>
    %126 = vector.extract_strided_slice %118 {offsets = [0, 96], sizes = [2, 32], strides = [1, 1]} : vector<2x128xf32> to vector<2x32xf32>
    %127 = math.tanh %125 : vector<2x32xf32>
    %128 = arith.mulf %126, %127 : vector<2x32xf32>
    %129 = arith.truncf %128 : vector<2x32xf32> to vector<2x32xbf16>
    %c2_i32_32 = arith.constant 2 : i32
    %130 = arith.addi %9, %c2_i32_32 : i32
    %131 = arith.index_cast %130 : i32 to index
    %132 = memref.load %arg1[%131] : memref<16xi32, #tpu.memory_space<smem>>
    %c1_i32_33 = arith.constant 1 : i32
    %133 = vector.broadcast %c1_i32_33 : i32 to vector<2x48xi32>
    %134 = arith.cmpi eq, %7, %133 : vector<2x48xi32>
    %c8_i32_34 = arith.constant 8 : i32
    %135 = arith.addi %9, %c8_i32_34 : i32
    %c2_i32_35 = arith.constant 2 : i32
    %136 = arith.addi %135, %c2_i32_35 : i32
    %137 = arith.index_cast %136 : i32 to index
    %138 = memref.load %arg1[%137] : memref<16xi32, #tpu.memory_space<smem>>
    %139 = vector.broadcast %138 : i32 to vector<2x48xi32>
    %140 = vector.broadcast %132 : i32 to vector<2x48xi32>
    %141 = arith.select %134, %139, %140 : vector<2x48xi1>, vector<2x48xi32>
    %142 = arith.cmpi eq, %6, %141 : vector<2x48xi32>
    %143 = arith.extui %142 : vector<2x48xi1> to vector<2x48xi32>
    %144 = arith.sitofp %143 : vector<2x48xi32> to vector<2x48xf32>
    %145 = arith.truncf %144 : vector<2x48xf32> to vector<2x48xbf16>
    %cst_36 = arith.constant dense<0.000000e+00> : vector<2x128xf32>
    %146 = tpu.matmul %145, %0, %cst_36 {dimension_numbers = #tpu.dot_dimension_numbers<[1], [0], [0], [1], [0, 0, 1, 1], [], []>} : vector<2x48xbf16>, vector<48x128xbf16>, vector<2x128xf32> -> vector<2x128xf32>
    %147 = vector.broadcast %1 : vector<1x128xf32> to vector<2x128xf32>
    %148 = arith.addf %146, %147 : vector<2x128xf32>
    %cst_37 = arith.constant dense<0.000000e+00> : vector<2x128xf32>
    %149 = tpu.matmul %108, %2, %cst_37 {dimension_numbers = #tpu.dot_dimension_numbers<[1], [0], [0], [1], [0, 0, 1, 1], [], []>} : vector<2x32xbf16>, vector<32x128xbf16>, vector<2x128xf32> -> vector<2x128xf32>
    %150 = arith.addf %148, %149 : vector<2x128xf32>
    %151 = arith.negf %150 : vector<2x128xf32>
    %152 = math.exp %151 : vector<2x128xf32>
    %cst_38 = arith.constant 1.000000e+00 : f32
    %153 = vector.broadcast %cst_38 : f32 to vector<2x128xf32>
    %154 = arith.addf %153, %152 : vector<2x128xf32>
    %155 = arith.divf %153, %154 : vector<2x128xf32>
    %156 = math.tanh %150 : vector<2x128xf32>
    %157 = vector.extract_strided_slice %155 {offsets = [0, 32], sizes = [2, 32], strides = [1, 1]} : vector<2x128xf32> to vector<2x32xf32>
    %158 = arith.mulf %157, %104 : vector<2x32xf32>
    %159 = vector.extract_strided_slice %155 {offsets = [0, 0], sizes = [2, 32], strides = [1, 1]} : vector<2x128xf32> to vector<2x32xf32>
    %160 = vector.extract_strided_slice %156 {offsets = [0, 64], sizes = [2, 32], strides = [1, 1]} : vector<2x128xf32> to vector<2x32xf32>
    %161 = arith.mulf %159, %160 : vector<2x32xf32>
    %162 = arith.addf %158, %161 : vector<2x32xf32>
    %163 = vector.extract_strided_slice %155 {offsets = [0, 96], sizes = [2, 32], strides = [1, 1]} : vector<2x128xf32> to vector<2x32xf32>
    %164 = math.tanh %162 : vector<2x32xf32>
    %165 = arith.mulf %163, %164 : vector<2x32xf32>
    %166 = arith.truncf %165 : vector<2x32xf32> to vector<2x32xbf16>
    %cst_39 = arith.constant dense<0.000000e+00> : vector<2x128xf32>
    %167 = tpu.matmul %166, %3, %cst_39 {dimension_numbers = #tpu.dot_dimension_numbers<[1], [0], [0], [1], [0, 0, 1, 1], [], []>} : vector<2x32xbf16>, vector<32x128xbf16>, vector<2x128xf32> -> vector<2x128xf32>
    %168 = vector.broadcast %4 : vector<1x128xf32> to vector<2x128xf32>
    %169 = arith.addf %167, %168 : vector<2x128xf32>
    %cst_40 = arith.constant dense<0.000000e+00> : vector<2x128xf32>
    %170 = tpu.matmul %129, %5, %cst_40 {dimension_numbers = #tpu.dot_dimension_numbers<[1], [0], [0], [1], [0, 0, 1, 1], [], []>} : vector<2x32xbf16>, vector<32x128xbf16>, vector<2x128xf32> -> vector<2x128xf32>
    %171 = arith.addf %169, %170 : vector<2x128xf32>
    %172 = arith.negf %171 : vector<2x128xf32>
    %173 = math.exp %172 : vector<2x128xf32>
    %cst_41 = arith.constant 1.000000e+00 : f32
    %174 = vector.broadcast %cst_41 : f32 to vector<2x128xf32>
    %175 = arith.addf %174, %173 : vector<2x128xf32>
    %176 = arith.divf %174, %175 : vector<2x128xf32>
    %177 = math.tanh %171 : vector<2x128xf32>
    %178 = vector.extract_strided_slice %176 {offsets = [0, 32], sizes = [2, 32], strides = [1, 1]} : vector<2x128xf32> to vector<2x32xf32>
    %179 = arith.mulf %178, %125 : vector<2x32xf32>
    %180 = vector.extract_strided_slice %176 {offsets = [0, 0], sizes = [2, 32], strides = [1, 1]} : vector<2x128xf32> to vector<2x32xf32>
    %181 = vector.extract_strided_slice %177 {offsets = [0, 64], sizes = [2, 32], strides = [1, 1]} : vector<2x128xf32> to vector<2x32xf32>
    %182 = arith.mulf %180, %181 : vector<2x32xf32>
    %183 = arith.addf %179, %182 : vector<2x32xf32>
    %184 = vector.extract_strided_slice %176 {offsets = [0, 96], sizes = [2, 32], strides = [1, 1]} : vector<2x128xf32> to vector<2x32xf32>
    %185 = math.tanh %183 : vector<2x32xf32>
    %186 = arith.mulf %184, %185 : vector<2x32xf32>
    %187 = arith.truncf %186 : vector<2x32xf32> to vector<2x32xbf16>
    %c3_i32 = arith.constant 3 : i32
    %188 = arith.addi %9, %c3_i32 : i32
    %189 = arith.index_cast %188 : i32 to index
    %190 = memref.load %arg1[%189] : memref<16xi32, #tpu.memory_space<smem>>
    %c1_i32_42 = arith.constant 1 : i32
    %191 = vector.broadcast %c1_i32_42 : i32 to vector<2x48xi32>
    %192 = arith.cmpi eq, %7, %191 : vector<2x48xi32>
    %c8_i32_43 = arith.constant 8 : i32
    %193 = arith.addi %9, %c8_i32_43 : i32
    %c3_i32_44 = arith.constant 3 : i32
    %194 = arith.addi %193, %c3_i32_44 : i32
    %195 = arith.index_cast %194 : i32 to index
    %196 = memref.load %arg1[%195] : memref<16xi32, #tpu.memory_space<smem>>
    %197 = vector.broadcast %196 : i32 to vector<2x48xi32>
    %198 = vector.broadcast %190 : i32 to vector<2x48xi32>
    %199 = arith.select %192, %197, %198 : vector<2x48xi1>, vector<2x48xi32>
    %200 = arith.cmpi eq, %6, %199 : vector<2x48xi32>
    %201 = arith.extui %200 : vector<2x48xi1> to vector<2x48xi32>
    %202 = arith.sitofp %201 : vector<2x48xi32> to vector<2x48xf32>
    %203 = arith.truncf %202 : vector<2x48xf32> to vector<2x48xbf16>
    %cst_45 = arith.constant dense<0.000000e+00> : vector<2x128xf32>
    %204 = tpu.matmul %203, %0, %cst_45 {dimension_numbers = #tpu.dot_dimension_numbers<[1], [0], [0], [1], [0, 0, 1, 1], [], []>} : vector<2x48xbf16>, vector<48x128xbf16>, vector<2x128xf32> -> vector<2x128xf32>
    %205 = vector.broadcast %1 : vector<1x128xf32> to vector<2x128xf32>
    %206 = arith.addf %204, %205 : vector<2x128xf32>
    %cst_46 = arith.constant dense<0.000000e+00> : vector<2x128xf32>
    %207 = tpu.matmul %166, %2, %cst_46 {dimension_numbers = #tpu.dot_dimension_numbers<[1], [0], [0], [1], [0, 0, 1, 1], [], []>} : vector<2x32xbf16>, vector<32x128xbf16>, vector<2x128xf32> -> vector<2x128xf32>
    %208 = arith.addf %206, %207 : vector<2x128xf32>
    %209 = arith.negf %208 : vector<2x128xf32>
    %210 = math.exp %209 : vector<2x128xf32>
    %cst_47 = arith.constant 1.000000e+00 : f32
    %211 = vector.broadcast %cst_47 : f32 to vector<2x128xf32>
    %212 = arith.addf %211, %210 : vector<2x128xf32>
    %213 = arith.divf %211, %212 : vector<2x128xf32>
    %214 = math.tanh %208 : vector<2x128xf32>
    %215 = vector.extract_strided_slice %213 {offsets = [0, 32], sizes = [2, 32], strides = [1, 1]} : vector<2x128xf32> to vector<2x32xf32>
    %216 = arith.mulf %215, %162 : vector<2x32xf32>
    %217 = vector.extract_strided_slice %213 {offsets = [0, 0], sizes = [2, 32], strides = [1, 1]} : vector<2x128xf32> to vector<2x32xf32>
    %218 = vector.extract_strided_slice %214 {offsets = [0, 64], sizes = [2, 32], strides = [1, 1]} : vector<2x128xf32> to vector<2x32xf32>
    %219 = arith.mulf %217, %218 : vector<2x32xf32>
    %220 = arith.addf %216, %219 : vector<2x32xf32>
    %221 = vector.extract_strided_slice %213 {offsets = [0, 96], sizes = [2, 32], strides = [1, 1]} : vector<2x128xf32> to vector<2x32xf32>
    %222 = math.tanh %220 : vector<2x32xf32>
    %223 = arith.mulf %221, %222 : vector<2x32xf32>
    %224 = arith.truncf %223 : vector<2x32xf32> to vector<2x32xbf16>
    %cst_48 = arith.constant dense<0.000000e+00> : vector<2x128xf32>
    %225 = tpu.matmul %224, %3, %cst_48 {dimension_numbers = #tpu.dot_dimension_numbers<[1], [0], [0], [1], [0, 0, 1, 1], [], []>} : vector<2x32xbf16>, vector<32x128xbf16>, vector<2x128xf32> -> vector<2x128xf32>
    %226 = vector.broadcast %4 : vector<1x128xf32> to vector<2x128xf32>
    %227 = arith.addf %225, %226 : vector<2x128xf32>
    %cst_49 = arith.constant dense<0.000000e+00> : vector<2x128xf32>
    %228 = tpu.matmul %187, %5, %cst_49 {dimension_numbers = #tpu.dot_dimension_numbers<[1], [0], [0], [1], [0, 0, 1, 1], [], []>} : vector<2x32xbf16>, vector<32x128xbf16>, vector<2x128xf32> -> vector<2x128xf32>
    %229 = arith.addf %227, %228 : vector<2x128xf32>
    %230 = arith.negf %229 : vector<2x128xf32>
    %231 = math.exp %230 : vector<2x128xf32>
    %cst_50 = arith.constant 1.000000e+00 : f32
    %232 = vector.broadcast %cst_50 : f32 to vector<2x128xf32>
    %233 = arith.addf %232, %231 : vector<2x128xf32>
    %234 = arith.divf %232, %233 : vector<2x128xf32>
    %235 = math.tanh %229 : vector<2x128xf32>
    %236 = vector.extract_strided_slice %234 {offsets = [0, 32], sizes = [2, 32], strides = [1, 1]} : vector<2x128xf32> to vector<2x32xf32>
    %237 = arith.mulf %236, %183 : vector<2x32xf32>
    %238 = vector.extract_strided_slice %234 {offsets = [0, 0], sizes = [2, 32], strides = [1, 1]} : vector<2x128xf32> to vector<2x32xf32>
    %239 = vector.extract_strided_slice %235 {offsets = [0, 64], sizes = [2, 32], strides = [1, 1]} : vector<2x128xf32> to vector<2x32xf32>
    %240 = arith.mulf %238, %239 : vector<2x32xf32>
    %241 = arith.addf %237, %240 : vector<2x32xf32>
    %242 = vector.extract_strided_slice %234 {offsets = [0, 96], sizes = [2, 32], strides = [1, 1]} : vector<2x128xf32> to vector<2x32xf32>
    %243 = math.tanh %241 : vector<2x32xf32>
    %244 = arith.mulf %242, %243 : vector<2x32xf32>
    %245 = arith.truncf %244 : vector<2x32xf32> to vector<2x32xbf16>
    %c4_i32 = arith.constant 4 : i32
    %246 = arith.addi %9, %c4_i32 : i32
    %247 = arith.index_cast %246 : i32 to index
    %248 = memref.load %arg1[%247] : memref<16xi32, #tpu.memory_space<smem>>
    %c1_i32_51 = arith.constant 1 : i32
    %249 = vector.broadcast %c1_i32_51 : i32 to vector<2x48xi32>
    %250 = arith.cmpi eq, %7, %249 : vector<2x48xi32>
    %c8_i32_52 = arith.constant 8 : i32
    %251 = arith.addi %9, %c8_i32_52 : i32
    %c4_i32_53 = arith.constant 4 : i32
    %252 = arith.addi %251, %c4_i32_53 : i32
    %253 = arith.index_cast %252 : i32 to index
    %254 = memref.load %arg1[%253] : memref<16xi32, #tpu.memory_space<smem>>
    %255 = vector.broadcast %254 : i32 to vector<2x48xi32>
    %256 = vector.broadcast %248 : i32 to vector<2x48xi32>
    %257 = arith.select %250, %255, %256 : vector<2x48xi1>, vector<2x48xi32>
    %258 = arith.cmpi eq, %6, %257 : vector<2x48xi32>
    %259 = arith.extui %258 : vector<2x48xi1> to vector<2x48xi32>
    %260 = arith.sitofp %259 : vector<2x48xi32> to vector<2x48xf32>
    %261 = arith.truncf %260 : vector<2x48xf32> to vector<2x48xbf16>
    %cst_54 = arith.constant dense<0.000000e+00> : vector<2x128xf32>
    %262 = tpu.matmul %261, %0, %cst_54 {dimension_numbers = #tpu.dot_dimension_numbers<[1], [0], [0], [1], [0, 0, 1, 1], [], []>} : vector<2x48xbf16>, vector<48x128xbf16>, vector<2x128xf32> -> vector<2x128xf32>
    %263 = vector.broadcast %1 : vector<1x128xf32> to vector<2x128xf32>
    %264 = arith.addf %262, %263 : vector<2x128xf32>
    %cst_55 = arith.constant dense<0.000000e+00> : vector<2x128xf32>
    %265 = tpu.matmul %224, %2, %cst_55 {dimension_numbers = #tpu.dot_dimension_numbers<[1], [0], [0], [1], [0, 0, 1, 1], [], []>} : vector<2x32xbf16>, vector<32x128xbf16>, vector<2x128xf32> -> vector<2x128xf32>
    %266 = arith.addf %264, %265 : vector<2x128xf32>
    %267 = arith.negf %266 : vector<2x128xf32>
    %268 = math.exp %267 : vector<2x128xf32>
    %cst_56 = arith.constant 1.000000e+00 : f32
    %269 = vector.broadcast %cst_56 : f32 to vector<2x128xf32>
    %270 = arith.addf %269, %268 : vector<2x128xf32>
    %271 = arith.divf %269, %270 : vector<2x128xf32>
    %272 = math.tanh %266 : vector<2x128xf32>
    %273 = vector.extract_strided_slice %271 {offsets = [0, 32], sizes = [2, 32], strides = [1, 1]} : vector<2x128xf32> to vector<2x32xf32>
    %274 = arith.mulf %273, %220 : vector<2x32xf32>
    %275 = vector.extract_strided_slice %271 {offsets = [0, 0], sizes = [2, 32], strides = [1, 1]} : vector<2x128xf32> to vector<2x32xf32>
    %276 = vector.extract_strided_slice %272 {offsets = [0, 64], sizes = [2, 32], strides = [1, 1]} : vector<2x128xf32> to vector<2x32xf32>
    %277 = arith.mulf %275, %276 : vector<2x32xf32>
    %278 = arith.addf %274, %277 : vector<2x32xf32>
    %279 = vector.extract_strided_slice %271 {offsets = [0, 96], sizes = [2, 32], strides = [1, 1]} : vector<2x128xf32> to vector<2x32xf32>
    %280 = math.tanh %278 : vector<2x32xf32>
    %281 = arith.mulf %279, %280 : vector<2x32xf32>
    %282 = arith.truncf %281 : vector<2x32xf32> to vector<2x32xbf16>
    %cst_57 = arith.constant dense<0.000000e+00> : vector<2x128xf32>
    %283 = tpu.matmul %282, %3, %cst_57 {dimension_numbers = #tpu.dot_dimension_numbers<[1], [0], [0], [1], [0, 0, 1, 1], [], []>} : vector<2x32xbf16>, vector<32x128xbf16>, vector<2x128xf32> -> vector<2x128xf32>
    %284 = vector.broadcast %4 : vector<1x128xf32> to vector<2x128xf32>
    %285 = arith.addf %283, %284 : vector<2x128xf32>
    %cst_58 = arith.constant dense<0.000000e+00> : vector<2x128xf32>
    %286 = tpu.matmul %245, %5, %cst_58 {dimension_numbers = #tpu.dot_dimension_numbers<[1], [0], [0], [1], [0, 0, 1, 1], [], []>} : vector<2x32xbf16>, vector<32x128xbf16>, vector<2x128xf32> -> vector<2x128xf32>
    %287 = arith.addf %285, %286 : vector<2x128xf32>
    %288 = arith.negf %287 : vector<2x128xf32>
    %289 = math.exp %288 : vector<2x128xf32>
    %cst_59 = arith.constant 1.000000e+00 : f32
    %290 = vector.broadcast %cst_59 : f32 to vector<2x128xf32>
    %291 = arith.addf %290, %289 : vector<2x128xf32>
    %292 = arith.divf %290, %291 : vector<2x128xf32>
    %293 = math.tanh %287 : vector<2x128xf32>
    %294 = vector.extract_strided_slice %292 {offsets = [0, 32], sizes = [2, 32], strides = [1, 1]} : vector<2x128xf32> to vector<2x32xf32>
    %295 = arith.mulf %294, %241 : vector<2x32xf32>
    %296 = vector.extract_strided_slice %292 {offsets = [0, 0], sizes = [2, 32], strides = [1, 1]} : vector<2x128xf32> to vector<2x32xf32>
    %297 = vector.extract_strided_slice %293 {offsets = [0, 64], sizes = [2, 32], strides = [1, 1]} : vector<2x128xf32> to vector<2x32xf32>
    %298 = arith.mulf %296, %297 : vector<2x32xf32>
    %299 = arith.addf %295, %298 : vector<2x32xf32>
    %300 = vector.extract_strided_slice %292 {offsets = [0, 96], sizes = [2, 32], strides = [1, 1]} : vector<2x128xf32> to vector<2x32xf32>
    %301 = math.tanh %299 : vector<2x32xf32>
    %302 = arith.mulf %300, %301 : vector<2x32xf32>
    %303 = arith.truncf %302 : vector<2x32xf32> to vector<2x32xbf16>
    %c5_i32 = arith.constant 5 : i32
    %304 = arith.addi %9, %c5_i32 : i32
    %305 = arith.index_cast %304 : i32 to index
    %306 = memref.load %arg1[%305] : memref<16xi32, #tpu.memory_space<smem>>
    %c1_i32_60 = arith.constant 1 : i32
    %307 = vector.broadcast %c1_i32_60 : i32 to vector<2x48xi32>
    %308 = arith.cmpi eq, %7, %307 : vector<2x48xi32>
    %c8_i32_61 = arith.constant 8 : i32
    %309 = arith.addi %9, %c8_i32_61 : i32
    %c5_i32_62 = arith.constant 5 : i32
    %310 = arith.addi %309, %c5_i32_62 : i32
    %311 = arith.index_cast %310 : i32 to index
    %312 = memref.load %arg1[%311] : memref<16xi32, #tpu.memory_space<smem>>
    %313 = vector.broadcast %312 : i32 to vector<2x48xi32>
    %314 = vector.broadcast %306 : i32 to vector<2x48xi32>
    %315 = arith.select %308, %313, %314 : vector<2x48xi1>, vector<2x48xi32>
    %316 = arith.cmpi eq, %6, %315 : vector<2x48xi32>
    %317 = arith.extui %316 : vector<2x48xi1> to vector<2x48xi32>
    %318 = arith.sitofp %317 : vector<2x48xi32> to vector<2x48xf32>
    %319 = arith.truncf %318 : vector<2x48xf32> to vector<2x48xbf16>
    %cst_63 = arith.constant dense<0.000000e+00> : vector<2x128xf32>
    %320 = tpu.matmul %319, %0, %cst_63 {dimension_numbers = #tpu.dot_dimension_numbers<[1], [0], [0], [1], [0, 0, 1, 1], [], []>} : vector<2x48xbf16>, vector<48x128xbf16>, vector<2x128xf32> -> vector<2x128xf32>
    %321 = vector.broadcast %1 : vector<1x128xf32> to vector<2x128xf32>
    %322 = arith.addf %320, %321 : vector<2x128xf32>
    %cst_64 = arith.constant dense<0.000000e+00> : vector<2x128xf32>
    %323 = tpu.matmul %282, %2, %cst_64 {dimension_numbers = #tpu.dot_dimension_numbers<[1], [0], [0], [1], [0, 0, 1, 1], [], []>} : vector<2x32xbf16>, vector<32x128xbf16>, vector<2x128xf32> -> vector<2x128xf32>
    %324 = arith.addf %322, %323 : vector<2x128xf32>
    %325 = arith.negf %324 : vector<2x128xf32>
    %326 = math.exp %325 : vector<2x128xf32>
    %cst_65 = arith.constant 1.000000e+00 : f32
    %327 = vector.broadcast %cst_65 : f32 to vector<2x128xf32>
    %328 = arith.addf %327, %326 : vector<2x128xf32>
    %329 = arith.divf %327, %328 : vector<2x128xf32>
    %330 = math.tanh %324 : vector<2x128xf32>
    %331 = vector.extract_strided_slice %329 {offsets = [0, 32], sizes = [2, 32], strides = [1, 1]} : vector<2x128xf32> to vector<2x32xf32>
    %332 = arith.mulf %331, %278 : vector<2x32xf32>
    %333 = vector.extract_strided_slice %329 {offsets = [0, 0], sizes = [2, 32], strides = [1, 1]} : vector<2x128xf32> to vector<2x32xf32>
    %334 = vector.extract_strided_slice %330 {offsets = [0, 64], sizes = [2, 32], strides = [1, 1]} : vector<2x128xf32> to vector<2x32xf32>
    %335 = arith.mulf %333, %334 : vector<2x32xf32>
    %336 = arith.addf %332, %335 : vector<2x32xf32>
    %337 = vector.extract_strided_slice %329 {offsets = [0, 96], sizes = [2, 32], strides = [1, 1]} : vector<2x128xf32> to vector<2x32xf32>
    %338 = math.tanh %336 : vector<2x32xf32>
    %339 = arith.mulf %337, %338 : vector<2x32xf32>
    %340 = arith.truncf %339 : vector<2x32xf32> to vector<2x32xbf16>
    %cst_66 = arith.constant dense<0.000000e+00> : vector<2x128xf32>
    %341 = tpu.matmul %340, %3, %cst_66 {dimension_numbers = #tpu.dot_dimension_numbers<[1], [0], [0], [1], [0, 0, 1, 1], [], []>} : vector<2x32xbf16>, vector<32x128xbf16>, vector<2x128xf32> -> vector<2x128xf32>
    %342 = vector.broadcast %4 : vector<1x128xf32> to vector<2x128xf32>
    %343 = arith.addf %341, %342 : vector<2x128xf32>
    %cst_67 = arith.constant dense<0.000000e+00> : vector<2x128xf32>
    %344 = tpu.matmul %303, %5, %cst_67 {dimension_numbers = #tpu.dot_dimension_numbers<[1], [0], [0], [1], [0, 0, 1, 1], [], []>} : vector<2x32xbf16>, vector<32x128xbf16>, vector<2x128xf32> -> vector<2x128xf32>
    %345 = arith.addf %343, %344 : vector<2x128xf32>
    %346 = arith.negf %345 : vector<2x128xf32>
    %347 = math.exp %346 : vector<2x128xf32>
    %cst_68 = arith.constant 1.000000e+00 : f32
    %348 = vector.broadcast %cst_68 : f32 to vector<2x128xf32>
    %349 = arith.addf %348, %347 : vector<2x128xf32>
    %350 = arith.divf %348, %349 : vector<2x128xf32>
    %351 = math.tanh %345 : vector<2x128xf32>
    %352 = vector.extract_strided_slice %350 {offsets = [0, 32], sizes = [2, 32], strides = [1, 1]} : vector<2x128xf32> to vector<2x32xf32>
    %353 = arith.mulf %352, %299 : vector<2x32xf32>
    %354 = vector.extract_strided_slice %350 {offsets = [0, 0], sizes = [2, 32], strides = [1, 1]} : vector<2x128xf32> to vector<2x32xf32>
    %355 = vector.extract_strided_slice %351 {offsets = [0, 64], sizes = [2, 32], strides = [1, 1]} : vector<2x128xf32> to vector<2x32xf32>
    %356 = arith.mulf %354, %355 : vector<2x32xf32>
    %357 = arith.addf %353, %356 : vector<2x32xf32>
    %358 = vector.extract_strided_slice %350 {offsets = [0, 96], sizes = [2, 32], strides = [1, 1]} : vector<2x128xf32> to vector<2x32xf32>
    %359 = math.tanh %357 : vector<2x32xf32>
    %360 = arith.mulf %358, %359 : vector<2x32xf32>
    %361 = arith.truncf %360 : vector<2x32xf32> to vector<2x32xbf16>
    %c6_i32 = arith.constant 6 : i32
    %362 = arith.addi %9, %c6_i32 : i32
    %363 = arith.index_cast %362 : i32 to index
    %364 = memref.load %arg1[%363] : memref<16xi32, #tpu.memory_space<smem>>
    %c1_i32_69 = arith.constant 1 : i32
    %365 = vector.broadcast %c1_i32_69 : i32 to vector<2x48xi32>
    %366 = arith.cmpi eq, %7, %365 : vector<2x48xi32>
    %c8_i32_70 = arith.constant 8 : i32
    %367 = arith.addi %9, %c8_i32_70 : i32
    %c6_i32_71 = arith.constant 6 : i32
    %368 = arith.addi %367, %c6_i32_71 : i32
    %369 = arith.index_cast %368 : i32 to index
    %370 = memref.load %arg1[%369] : memref<16xi32, #tpu.memory_space<smem>>
    %371 = vector.broadcast %370 : i32 to vector<2x48xi32>
    %372 = vector.broadcast %364 : i32 to vector<2x48xi32>
    %373 = arith.select %366, %371, %372 : vector<2x48xi1>, vector<2x48xi32>
    %374 = arith.cmpi eq, %6, %373 : vector<2x48xi32>
    %375 = arith.extui %374 : vector<2x48xi1> to vector<2x48xi32>
    %376 = arith.sitofp %375 : vector<2x48xi32> to vector<2x48xf32>
    %377 = arith.truncf %376 : vector<2x48xf32> to vector<2x48xbf16>
    %cst_72 = arith.constant dense<0.000000e+00> : vector<2x128xf32>
    %378 = tpu.matmul %377, %0, %cst_72 {dimension_numbers = #tpu.dot_dimension_numbers<[1], [0], [0], [1], [0, 0, 1, 1], [], []>} : vector<2x48xbf16>, vector<48x128xbf16>, vector<2x128xf32> -> vector<2x128xf32>
    %379 = vector.broadcast %1 : vector<1x128xf32> to vector<2x128xf32>
    %380 = arith.addf %378, %379 : vector<2x128xf32>
    %cst_73 = arith.constant dense<0.000000e+00> : vector<2x128xf32>
    %381 = tpu.matmul %340, %2, %cst_73 {dimension_numbers = #tpu.dot_dimension_numbers<[1], [0], [0], [1], [0, 0, 1, 1], [], []>} : vector<2x32xbf16>, vector<32x128xbf16>, vector<2x128xf32> -> vector<2x128xf32>
    %382 = arith.addf %380, %381 : vector<2x128xf32>
    %383 = arith.negf %382 : vector<2x128xf32>
    %384 = math.exp %383 : vector<2x128xf32>
    %cst_74 = arith.constant 1.000000e+00 : f32
    %385 = vector.broadcast %cst_74 : f32 to vector<2x128xf32>
    %386 = arith.addf %385, %384 : vector<2x128xf32>
    %387 = arith.divf %385, %386 : vector<2x128xf32>
    %388 = math.tanh %382 : vector<2x128xf32>
    %389 = vector.extract_strided_slice %387 {offsets = [0, 32], sizes = [2, 32], strides = [1, 1]} : vector<2x128xf32> to vector<2x32xf32>
    %390 = arith.mulf %389, %336 : vector<2x32xf32>
    %391 = vector.extract_strided_slice %387 {offsets = [0, 0], sizes = [2, 32], strides = [1, 1]} : vector<2x128xf32> to vector<2x32xf32>
    %392 = vector.extract_strided_slice %388 {offsets = [0, 64], sizes = [2, 32], strides = [1, 1]} : vector<2x128xf32> to vector<2x32xf32>
    %393 = arith.mulf %391, %392 : vector<2x32xf32>
    %394 = arith.addf %390, %393 : vector<2x32xf32>
    %395 = vector.extract_strided_slice %387 {offsets = [0, 96], sizes = [2, 32], strides = [1, 1]} : vector<2x128xf32> to vector<2x32xf32>
    %396 = math.tanh %394 : vector<2x32xf32>
    %397 = arith.mulf %395, %396 : vector<2x32xf32>
    %398 = arith.truncf %397 : vector<2x32xf32> to vector<2x32xbf16>
    %cst_75 = arith.constant dense<0.000000e+00> : vector<2x128xf32>
    %399 = tpu.matmul %398, %3, %cst_75 {dimension_numbers = #tpu.dot_dimension_numbers<[1], [0], [0], [1], [0, 0, 1, 1], [], []>} : vector<2x32xbf16>, vector<32x128xbf16>, vector<2x128xf32> -> vector<2x128xf32>
    %400 = vector.broadcast %4 : vector<1x128xf32> to vector<2x128xf32>
    %401 = arith.addf %399, %400 : vector<2x128xf32>
    %cst_76 = arith.constant dense<0.000000e+00> : vector<2x128xf32>
    %402 = tpu.matmul %361, %5, %cst_76 {dimension_numbers = #tpu.dot_dimension_numbers<[1], [0], [0], [1], [0, 0, 1, 1], [], []>} : vector<2x32xbf16>, vector<32x128xbf16>, vector<2x128xf32> -> vector<2x128xf32>
    %403 = arith.addf %401, %402 : vector<2x128xf32>
    %404 = arith.negf %403 : vector<2x128xf32>
    %405 = math.exp %404 : vector<2x128xf32>
    %cst_77 = arith.constant 1.000000e+00 : f32
    %406 = vector.broadcast %cst_77 : f32 to vector<2x128xf32>
    %407 = arith.addf %406, %405 : vector<2x128xf32>
    %408 = arith.divf %406, %407 : vector<2x128xf32>
    %409 = math.tanh %403 : vector<2x128xf32>
    %410 = vector.extract_strided_slice %408 {offsets = [0, 32], sizes = [2, 32], strides = [1, 1]} : vector<2x128xf32> to vector<2x32xf32>
    %411 = arith.mulf %410, %357 : vector<2x32xf32>
    %412 = vector.extract_strided_slice %408 {offsets = [0, 0], sizes = [2, 32], strides = [1, 1]} : vector<2x128xf32> to vector<2x32xf32>
    %413 = vector.extract_strided_slice %409 {offsets = [0, 64], sizes = [2, 32], strides = [1, 1]} : vector<2x128xf32> to vector<2x32xf32>
    %414 = arith.mulf %412, %413 : vector<2x32xf32>
    %415 = arith.addf %411, %414 : vector<2x32xf32>
    %416 = vector.extract_strided_slice %408 {offsets = [0, 96], sizes = [2, 32], strides = [1, 1]} : vector<2x128xf32> to vector<2x32xf32>
    %417 = math.tanh %415 : vector<2x32xf32>
    %418 = arith.mulf %416, %417 : vector<2x32xf32>
    %419 = arith.truncf %418 : vector<2x32xf32> to vector<2x32xbf16>
    %c7_i32 = arith.constant 7 : i32
    %420 = arith.addi %9, %c7_i32 : i32
    %421 = arith.index_cast %420 : i32 to index
    %422 = memref.load %arg1[%421] : memref<16xi32, #tpu.memory_space<smem>>
    %c1_i32_78 = arith.constant 1 : i32
    %423 = vector.broadcast %c1_i32_78 : i32 to vector<2x48xi32>
    %424 = arith.cmpi eq, %7, %423 : vector<2x48xi32>
    %c8_i32_79 = arith.constant 8 : i32
    %425 = arith.addi %9, %c8_i32_79 : i32
    %c7_i32_80 = arith.constant 7 : i32
    %426 = arith.addi %425, %c7_i32_80 : i32
    %427 = arith.index_cast %426 : i32 to index
    %428 = memref.load %arg1[%427] : memref<16xi32, #tpu.memory_space<smem>>
    %429 = vector.broadcast %428 : i32 to vector<2x48xi32>
    %430 = vector.broadcast %422 : i32 to vector<2x48xi32>
    %431 = arith.select %424, %429, %430 : vector<2x48xi1>, vector<2x48xi32>
    %432 = arith.cmpi eq, %6, %431 : vector<2x48xi32>
    %433 = arith.extui %432 : vector<2x48xi1> to vector<2x48xi32>
    %434 = arith.sitofp %433 : vector<2x48xi32> to vector<2x48xf32>
    %435 = arith.truncf %434 : vector<2x48xf32> to vector<2x48xbf16>
    %cst_81 = arith.constant dense<0.000000e+00> : vector<2x128xf32>
    %436 = tpu.matmul %435, %0, %cst_81 {dimension_numbers = #tpu.dot_dimension_numbers<[1], [0], [0], [1], [0, 0, 1, 1], [], []>} : vector<2x48xbf16>, vector<48x128xbf16>, vector<2x128xf32> -> vector<2x128xf32>
    %437 = vector.broadcast %1 : vector<1x128xf32> to vector<2x128xf32>
    %438 = arith.addf %436, %437 : vector<2x128xf32>
    %cst_82 = arith.constant dense<0.000000e+00> : vector<2x128xf32>
    %439 = tpu.matmul %398, %2, %cst_82 {dimension_numbers = #tpu.dot_dimension_numbers<[1], [0], [0], [1], [0, 0, 1, 1], [], []>} : vector<2x32xbf16>, vector<32x128xbf16>, vector<2x128xf32> -> vector<2x128xf32>
    %440 = arith.addf %438, %439 : vector<2x128xf32>
    %441 = arith.negf %440 : vector<2x128xf32>
    %442 = math.exp %441 : vector<2x128xf32>
    %cst_83 = arith.constant 1.000000e+00 : f32
    %443 = vector.broadcast %cst_83 : f32 to vector<2x128xf32>
    %444 = arith.addf %443, %442 : vector<2x128xf32>
    %445 = arith.divf %443, %444 : vector<2x128xf32>
    %446 = math.tanh %440 : vector<2x128xf32>
    %447 = vector.extract_strided_slice %445 {offsets = [0, 32], sizes = [2, 32], strides = [1, 1]} : vector<2x128xf32> to vector<2x32xf32>
    %448 = arith.mulf %447, %394 : vector<2x32xf32>
    %449 = vector.extract_strided_slice %445 {offsets = [0, 0], sizes = [2, 32], strides = [1, 1]} : vector<2x128xf32> to vector<2x32xf32>
    %450 = vector.extract_strided_slice %446 {offsets = [0, 64], sizes = [2, 32], strides = [1, 1]} : vector<2x128xf32> to vector<2x32xf32>
    %451 = arith.mulf %449, %450 : vector<2x32xf32>
    %452 = arith.addf %448, %451 : vector<2x32xf32>
    %453 = vector.extract_strided_slice %445 {offsets = [0, 96], sizes = [2, 32], strides = [1, 1]} : vector<2x128xf32> to vector<2x32xf32>
    %454 = math.tanh %452 : vector<2x32xf32>
    %455 = arith.mulf %453, %454 : vector<2x32xf32>
    %456 = arith.truncf %455 : vector<2x32xf32> to vector<2x32xbf16>
    %cst_84 = arith.constant dense<0.000000e+00> : vector<2x128xf32>
    %457 = tpu.matmul %456, %3, %cst_84 {dimension_numbers = #tpu.dot_dimension_numbers<[1], [0], [0], [1], [0, 0, 1, 1], [], []>} : vector<2x32xbf16>, vector<32x128xbf16>, vector<2x128xf32> -> vector<2x128xf32>
    %458 = vector.broadcast %4 : vector<1x128xf32> to vector<2x128xf32>
    %459 = arith.addf %457, %458 : vector<2x128xf32>
    %cst_85 = arith.constant dense<0.000000e+00> : vector<2x128xf32>
    %460 = tpu.matmul %419, %5, %cst_85 {dimension_numbers = #tpu.dot_dimension_numbers<[1], [0], [0], [1], [0, 0, 1, 1], [], []>} : vector<2x32xbf16>, vector<32x128xbf16>, vector<2x128xf32> -> vector<2x128xf32>
    %461 = arith.addf %459, %460 : vector<2x128xf32>
    %462 = arith.negf %461 : vector<2x128xf32>
    %463 = math.exp %462 : vector<2x128xf32>
    %cst_86 = arith.constant 1.000000e+00 : f32
    %464 = vector.broadcast %cst_86 : f32 to vector<2x128xf32>
    %465 = arith.addf %464, %463 : vector<2x128xf32>
    %466 = arith.divf %464, %465 : vector<2x128xf32>
    %467 = math.tanh %461 : vector<2x128xf32>
    %468 = vector.extract_strided_slice %466 {offsets = [0, 32], sizes = [2, 32], strides = [1, 1]} : vector<2x128xf32> to vector<2x32xf32>
    %469 = arith.mulf %468, %415 : vector<2x32xf32>
    %470 = vector.extract_strided_slice %466 {offsets = [0, 0], sizes = [2, 32], strides = [1, 1]} : vector<2x128xf32> to vector<2x32xf32>
    %471 = vector.extract_strided_slice %467 {offsets = [0, 64], sizes = [2, 32], strides = [1, 1]} : vector<2x128xf32> to vector<2x32xf32>
    %472 = arith.mulf %470, %471 : vector<2x32xf32>
    %473 = arith.addf %469, %472 : vector<2x32xf32>
    %474 = vector.extract_strided_slice %466 {offsets = [0, 96], sizes = [2, 32], strides = [1, 1]} : vector<2x128xf32> to vector<2x32xf32>
    %475 = math.tanh %473 : vector<2x32xf32>
    %476 = arith.mulf %474, %475 : vector<2x32xf32>
    %477 = arith.truncf %476 : vector<2x32xf32> to vector<2x32xbf16>
    %c0_87 = arith.constant 0 : index
    %c0_88 = arith.constant 0 : index
    %478 = vector.load %arg8[%c0_87, %c0_88] : memref<32x128xbf16, #tpu.memory_space<vmem>>, vector<32x128xbf16>
    %cst_89 = arith.constant dense<0.000000e+00> : vector<2x128xf32>
    %479 = tpu.matmul %477, %478, %cst_89 {dimension_numbers = #tpu.dot_dimension_numbers<[1], [0], [0], [1], [0, 0, 1, 1], [], []>} : vector<2x32xbf16>, vector<32x128xbf16>, vector<2x128xf32> -> vector<2x128xf32>
    %c0_90 = arith.constant 0 : index
    %c0_91 = arith.constant 0 : index
    %480 = vector.load %arg9[%c0_90, %c0_91] : memref<1x128xf32, #tpu.memory_space<vmem>>, vector<1x128xf32>
    %481 = vector.broadcast %480 : vector<1x128xf32> to vector<2x128xf32>
    %482 = arith.addf %479, %481 : vector<2x128xf32>
    %c0_92 = arith.constant 0 : index
    %c0_93 = arith.constant 0 : index
    %483 = vector.load %arg10[%c0_92, %c0_93] : memref<2x128xf32, #tpu.memory_space<vmem>>, vector<2x128xf32>
    tpu.vector_store %arg10[%c0_92, %c0_93], %482 {strides = array<i32>} : memref<2x128xf32, #tpu.memory_space<vmem>>, vector<2x128xf32>,
    return
  }
  func.func @transform_0(%arg0: i32) -> i32 {
    %c0_i32 = arith.constant 0 : i32
    %c0_i32_0 = arith.constant 0 : i32
    return %c0_i32 : i32
  }
  func.func @transform_1(%arg0: i32) -> (i32, i32) {
    %c0_i32 = arith.constant 0 : i32
    %c0_i32_0 = arith.constant 0 : i32
    %c0_i32_1 = arith.constant 0 : i32
    return %c0_i32, %c0_i32_0 : i32, i32
  }
  func.func @transform_2(%arg0: i32) -> (i32, i32) {
    %c0_i32 = arith.constant 0 : i32
    %c0_i32_0 = arith.constant 0 : i32
    %c0_i32_1 = arith.constant 0 : i32
    return %c0_i32, %c0_i32_0 : i32, i32
  }
  func.func @transform_3(%arg0: i32) -> (i32, i32) {
    %c0_i32 = arith.constant 0 : i32
    %c0_i32_0 = arith.constant 0 : i32
    %c0_i32_1 = arith.constant 0 : i32
    return %c0_i32, %c0_i32_0 : i32, i32
  }
  func.func @transform_4(%arg0: i32) -> (i32, i32) {
    %c0_i32 = arith.constant 0 : i32
    %c0_i32_0 = arith.constant 0 : i32
    %c0_i32_1 = arith.constant 0 : i32
    return %c0_i32, %c0_i32_0 : i32, i32
  }
  func.func @transform_5(%arg0: i32) -> (i32, i32) {
    %c0_i32 = arith.constant 0 : i32
    %c0_i32_0 = arith.constant 0 : i32
    %c0_i32_1 = arith.constant 0 : i32
    return %c0_i32, %c0_i32_0 : i32, i32
  }
  func.func @transform_6(%arg0: i32) -> (i32, i32) {
    %c0_i32 = arith.constant 0 : i32
    %c0_i32_0 = arith.constant 0 : i32
    %c0_i32_1 = arith.constant 0 : i32
    return %c0_i32, %c0_i32_0 : i32, i32
  }
  func.func @transform_7(%arg0: i32) -> (i32, i32) {
    %c0_i32 = arith.constant 0 : i32
    %c0_i32_0 = arith.constant 0 : i32
    %c0_i32_1 = arith.constant 0 : i32
    return %c0_i32, %c0_i32_0 : i32, i32
  }
  func.func @transform_8(%arg0: i32) -> (i32, i32) {
    %c0_i32 = arith.constant 0 : i32
    %c0_i32_0 = arith.constant 0 : i32
    %c0_i32_1 = arith.constant 0 : i32
    return %c0_i32, %c0_i32_0 : i32, i32
  }
  func.func @transform_9(%arg0: i32) -> (i32, i32) {
    %c0_i32 = arith.constant 0 : i32
    %c0_i32_0 = arith.constant 0 : i32
    return %arg0, %c0_i32 : i32, i32
  }
}

</mosaic_0001>

<llo_original>
// kernel: next_syllable_lstm_forward.1
$region0: #{next_syllable_lstm_forward.1}
  #allocation0 [shape = 'u32[]', space=smem, size = 0x4, offset = 0x4, fixed_abs, tag = 'smem constant byte address 0x4 - core index']
  #allocation1 [shape = 'u32[144,128]{1,0:T(1,128)}', space=vmem, size = 0x12000, scoped, tag = 'internal scratch']
  %s0 = inlined_call_operand.vmem [shape: s32[16], index: 0, kind: input, shape index: {}]
  %s1 = inlined_call_operand.hbm [shape: bf16[48,128], index: 1, kind: input, shape index: {}]
  %s2 = inlined_call_operand.vmem [shape: f32[1,128], index: 2, kind: input, shape index: {}]
  %s3 = inlined_call_operand.vmem [shape: bf16[32,128], index: 3, kind: input, shape index: {}]
  %s4 = inlined_call_operand.vmem [shape: bf16[32,128], index: 4, kind: input, shape index: {}]
  %s5 = inlined_call_operand.vmem [shape: f32[1,128], index: 5, kind: input, shape index: {}]
  %s6 = inlined_call_operand.hbm [shape: bf16[32,128], index: 6, kind: input, shape index: {}]
  %s7 = inlined_call_operand.hbm [shape: bf16[32,128], index: 7, kind: input, shape index: {}]
  %s8 = inlined_call_operand.hbm [shape: f32[1,128], index: 8, kind: input, shape index: {}]
  %s9 = inlined_call_operand.hbm [shape: f32[2,128], index: 9, kind: output, shape index: {}]
  %s10 = sld [smem:[#allocation0]]
  $region66: #{next_syllable_lstm_forward.1} parent=0
    _
  %s12 = ssub.s32 1, %s10
  %s13 = scalar_select 0, %s12, %s10
  $region1: #{next_syllable_lstm_forward.1} parent=0
    #allocation2 [shape = 'u8[512]{0}', space=smem, size = 0x200, scoped, tag = 'input window, operand 0, single buffered']
    #allocation3 [shape = 's32[1]{0}', space=sflag, size = 0x4, scoped, tag = 'scoped memory for next_syllable_lstm_forward.1']
    #allocation4 [shape = 's32[1]{0}', space=sflag, size = 0x4, scoped, tag = 'scoped memory for next_syllable_lstm_forward.1']
    #allocation5 [shape = 's32[1]{0}', space=sflag, size = 0x4, scoped, tag = 'scoped memory for next_syllable_lstm_forward.1']
    #allocation6 [shape = 'u8[12288]{0}', space=vmem, size = 0x3000, scoped, tag = 'input window, operand 1, single buffered']
    #allocation7 [shape = 'u8[8192]{0}', space=vmem, size = 0x2000, scoped, tag = 'input window, operand 6, single buffered']
    #allocation8 [shape = 's32[1]{0}', space=sflag, size = 0x4, scoped, tag = 'scoped memory for next_syllable_lstm_forward.1']
    #allocation9 [shape = 'u8[8192]{0}', space=vmem, size = 0x2000, scoped, tag = 'input window, operand 7, single buffered']
    #allocation10 [shape = 'u8[512]{0}', space=vmem, size = 0x400, scoped, tag = 'input window, operand 8, single buffered']
    #allocation11 [shape = 's32[1]{0}', space=sflag, size = 0x4, scoped, tag = 'scoped memory for next_syllable_lstm_forward.1']
    #allocation12 [shape = 'u8[1024]{0}', space=vmem, size = 0x400, scoped, tag = 'output window, operand 0, single buffered']
    %14 = vsyncpa [#allocation5], 0
    %15 = vsyncpa [#allocation3], 0
    %16 = vsyncpa [#allocation8], 0
    %17 = vsyncpa [#allocation11], 0
    %18 = vsyncpa [#allocation4], 0
    // Predicated region
    $region2: #{next_syllable_lstm_forward.1} parent=1 // pred_check
      _
    $region3: #{next_syllable_lstm_forward.1} parent=1 // pred_check_branch
      %20 = sbr.rel (0) target = $region5
    $region4: #{next_syllable_lstm_forward.1} parent=1 // pred_region
      %s22 = ssub.s32 16, 16
      %23 = vsyncadd [#allocation5], %s22
      %s25 = sshll.u32 %s0, 4
      %s26 = int_to_ptr.vmem [resolvable:$true] %s25
      %28 = dma.vmem_to_smem %s26, 16, [#allocation2], [#allocation5]
    $region5: #{next_syllable_lstm_forward.1} parent=1 // pred_fallthru
      _
    // Predicated region
    $region6: #{next_syllable_lstm_forward.1} parent=1 // pred_check
      _
    $region7: #{next_syllable_lstm_forward.1} parent=1 // pred_check_branch
      %30 = sbr.rel (0) target = $region9
    $region8: #{next_syllable_lstm_forward.1} parent=1 // pred_region
      %s32 = ssub.s32 384, 384
      %33 = vsyncadd [#allocation3], %s32
      %s34 = sshll.u32 [#allocation6], 4
      %s35 = int_to_ptr.vmem [resolvable:$true] %s34
      %40 = dma.hbm_to_vmem [thread:$0]  %s1, 384, %s35, [#allocation3], 64, 64, 4
    $region9: #{next_syllable_lstm_forward.1} parent=1 // pred_fallthru
      _
    // Predicated region
    $region10: #{next_syllable_lstm_forward.1} parent=1 // pred_check
      _
    $region11: #{next_syllable_lstm_forward.1} parent=1 // pred_check_branch
      %42 = sbr.rel (0) target = $region13
    $region12: #{next_syllable_lstm_forward.1} parent=1 // pred_region
      _
    $region13: #{next_syllable_lstm_forward.1} parent=1 // pred_fallthru
      _
    // Predicated region
    $region14: #{next_syllable_lstm_forward.1} parent=1 // pred_check
      _
    $region15: #{next_syllable_lstm_forward.1} parent=1 // pred_check_branch
      %44 = sbr.rel (0) target = $region17
    $region16: #{next_syllable_lstm_forward.1} parent=1 // pred_region
      _
    $region17: #{next_syllable_lstm_forward.1} parent=1 // pred_fallthru
      _
    // Predicated region
    $region18: #{next_syllable_lstm_forward.1} parent=1 // pred_check
      _
    $region19: #{next_syllable_lstm_forward.1} parent=1 // pred_check_branch
      %46 = sbr.rel (0) target = $region21
    $region20: #{next_syllable_lstm_forward.1} parent=1 // pred_region
      _
    $region21: #{next_syllable_lstm_forward.1} parent=1 // pred_fallthru
      _
    // Predicated region
    $region22: #{next_syllable_lstm_forward.1} parent=1 // pred_check
      _
    $region23: #{next_syllable_lstm_forward.1} parent=1 // pred_check_branch
      %48 = sbr.rel (0) target = $region25
    $region24: #{next_syllable_lstm_forward.1} parent=1 // pred_region
      _
    $region25: #{next_syllable_lstm_forward.1} parent=1 // pred_fallthru
      _
    // Predicated region
    $region26: #{next_syllable_lstm_forward.1} parent=1 // pred_check
      _
    $region27: #{next_syllable_lstm_forward.1} parent=1 // pred_check_branch
      %50 = sbr.rel (0) target = $region29
    $region28: #{next_syllable_lstm_forward.1} parent=1 // pred_region
      %s52 = ssub.s32 256, 256
      %53 = vsyncadd [#allocation8], %s52
      %s54 = sshll.u32 [#allocation7], 4
      %s55 = int_to_ptr.vmem [resolvable:$true] %s54
      %60 = dma.hbm_to_vmem [thread:$0]  %s6, 256, %s55, [#allocation8], 64, 64, 4
    $region29: #{next_syllable_lstm_forward.1} parent=1 // pred_fallthru
      _
    // Predicated region
    $region30: #{next_syllable_lstm_forward.1} parent=1 // pred_check
      _
    $region31: #{next_syllable_lstm_forward.1} parent=1 // pred_check_branch
      %62 = sbr.rel (0) target = $region33
    $region32: #{next_syllable_lstm_forward.1} parent=1 // pred_region
      %s64 = ssub.s32 256, 256
      %65 = vsyncadd [#allocation8], %s64
      %s66 = sshll.u32 [#allocation9], 4
      %s67 = int_to_ptr.vmem [resolvable:$true] %s66
      %72 = dma.hbm_to_vmem [thread:$0]  %s7, 256, %s67, [#allocation8], 64, 64, 4
    $region33: #{next_syllable_lstm_forward.1} parent=1 // pred_fallthru
      _
    // Predicated region
    $region34: #{next_syllable_lstm_forward.1} parent=1 // pred_check
      _
    $region35: #{next_syllable_lstm_forward.1} parent=1 // pred_check_branch
      %74 = sbr.rel (0) target = $region37
    $region36: #{next_syllable_lstm_forward.1} parent=1 // pred_region
      %s76 = ssub.s32 16, 16
      %77 = vsyncadd [#allocation11], %s76
      %s79 = sshll.u32 [#allocation10], 4
      %s80 = int_to_ptr.vmem [resolvable:$true] %s79
      %82 = dma.hbm_to_vmem [thread:$0]  %s8, 16, %s80, [#allocation11]
    $region37: #{next_syllable_lstm_forward.1} parent=1 // pred_fallthru
      _
    // Predicated region
    $region38: #{next_syllable_lstm_forward.1} parent=1 // pred_check
      _
    $region39: #{next_syllable_lstm_forward.1} parent=1 // pred_check_branch
      %84 = sbr.rel (0) target = $region41
    $region40: #{next_syllable_lstm_forward.1} parent=1 // pred_region
      %85 = dma.done [#allocation5], 16
    $region41: #{next_syllable_lstm_forward.1} parent=1 // pred_fallthru
      _
    // Predicated region
    $region42: #{next_syllable_lstm_forward.1} parent=1 // pred_check
      _
    $region43: #{next_syllable_lstm_forward.1} parent=1 // pred_check_branch
      %87 = sbr.rel (0) target = $region45
    $region44: #{next_syllable_lstm_forward.1} parent=1 // pred_region
      %88 = dma.done [#allocation3], 384
    $region45: #{next_syllable_lstm_forward.1} parent=1 // pred_fallthru
      _
    // Predicated region
    $region46: #{next_syllable_lstm_forward.1} parent=1 // pred_check
      _
    $region47: #{next_syllable_lstm_forward.1} parent=1 // pred_check_branch
      %90 = sbr.rel (0) target = $region49
    $region48: #{next_syllable_lstm_forward.1} parent=1 // pred_region
      %91 = dma.done [#allocation8], 256
    $region49: #{next_syllable_lstm_forward.1} parent=1 // pred_fallthru
      _
    // Predicated region
    $region50: #{next_syllable_lstm_forward.1} parent=1 // pred_check
      _
    $region51: #{next_syllable_lstm_forward.1} parent=1 // pred_check_branch
      %93 = sbr.rel (0) target = $region53
    $region52: #{next_syllable_lstm_forward.1} parent=1 // pred_region
      %94 = dma.done [#allocation8], 256
    $region53: #{next_syllable_lstm_forward.1} parent=1 // pred_fallthru
      _
    // Predicated region
    $region54: #{next_syllable_lstm_forward.1} parent=1 // pred_check
      _
    $region55: #{next_syllable_lstm_forward.1} parent=1 // pred_check_branch
      %96 = sbr.rel (0) target = $region57
    $region56: #{next_syllable_lstm_forward.1} parent=1 // pred_region
      %97 = dma.done [#allocation11], 16
    $region57: #{next_syllable_lstm_forward.1} parent=1 // pred_fallthru
      _
    %98 = sfence
    %v100 = vld [vmem:[#allocation6] sm:$0xf]
    %v101 = vld [vmem:[#allocation6 + $0x4] sm:$0xf]
    %v102 = vld [vmem:[#allocation6 + $0x8] sm:$0xf]
    %v103 = vld [vmem:[#allocation6 + $0xc] sm:$0xf]
    %v104 = vld [vmem:[#allocation6 + $0x10] sm:$0xf]
    %v105 = vld [vmem:[#allocation6 + $0x14] sm:$0xf]
    %v106 = vld [vmem:[%s2] sm:$0x1]
    %v107 = vld [vmem:[%s3] sm:$0xf]
    %v108 = vld [vmem:[%s3 + $0x4] sm:$0xf]
    %v109 = vld [vmem:[%s3 + $0x8] sm:$0xf]
    %v110 = vld [vmem:[%s3 + $0xc] sm:$0xf]
    %v111 = vld [vmem:[%s4] sm:$0xf]
    %v112 = vld [vmem:[%s4 + $0x4] sm:$0xf]
    %v113 = vld [vmem:[%s4 + $0x8] sm:$0xf]
    %v114 = vld [vmem:[%s4 + $0xc] sm:$0xf]
    %v115 = vld [vmem:[%s5] sm:$0x1]
    %v116 = vld [vmem:[#allocation7] sm:$0xf]
    %v117 = vld [vmem:[#allocation7 + $0x4] sm:$0xf]
    %v118 = vld [vmem:[#allocation7 + $0x8] sm:$0xf]
    %v119 = vld [vmem:[#allocation7 + $0xc] sm:$0xf]
    %v120 = vlaneseq
    %v121 = vand.u32 %v120, 127
    %v122 = vlaneseq
    %v123 = vshrl.u32 %v122, 7
    %s124 = smul.u32 0, 16
    %s125 = sld [smem:[#allocation2 + %s124]]
    %vm126 = vcmp.eq.s32.totalorder %v123, 1
    %s127 = sadd.s32 %s124, 8
    %s128 = sld [smem:[#allocation2 + %s127]]
    %v129 = vstv %s128
    %v130 = vstv %s125
    %v131 = vsel %vm126, %v129, %v130
    %vm132 = vcmp.eq.s32.totalorder %v121, %v131
    %v133 = vsel %vm132, 1, 0
    %v134 = vcvt.s32.f32 %v133
    %v135 = vpack.c.bf16 %v134, %v134
    %v137 = vlaneseq
    %v138 = vshrl.u32 %v137, 7
    %v139 = vsub.s32 0, %v138
    %v140 = vrot.slane %v106, %v139
    %v148 = vunpack.c.l.b16 %v100
    %v149 = vunpack.c.l.b16 %v101
    %v150 = vunpack.c.l.b16 %v102
    %v151 = vunpack.c.l.b16 %v103
    %v152 = vunpack.c.l.b16 %v104
    %v153 = vunpack.c.l.b16 %v105
    %v154 = vpack.c.b16 %v149, %v148
    %v155 = vpack.c.b16 %v151, %v150
    %v156 = vpack.c.b16 %v153, %v152
    %vm160 = vcmask 392192
    %v162 = vsel %vm160, %v135, 0
    %164 = vmatprep.subr.bf16.mxu0 0
    %165 = vmatpush1.bf16.msra.mxu0 %v154
    %166 = vmatprep.subr.bf16.mxu0 0
    %167 = vmatpush1.bf16.msra.mxu0 %v155
    %168 = vmatprep.subr.bf16.mxu0 0
    %169 = vmatpush1.bf16.msra.mxu0 %v156
    %170 = vmatprep.subr.bf16.mxu0 0
    %171 = vmatpush1.bf16.msra.mxu0 0
    %172 = vmatprep.subr.bf16.mxu0 0
    %173 = vmatpush1.bf16.msra.mxu0 0
    %174 = vmatprep.subr.bf16.mxu0 0
    %175 = vmatpush1.bf16.msra.mxu0 0
    %176 = vmatprep.subr.bf16.mxu0 0
    %177 = vmatpush1.bf16.msra.mxu0 0
    %178 = vmatprep.subr.bf16.mxu0 0
    %179 = vmatpush1.bf16.msra.mxu0 0
    %180 = vmatprep.subr.bf16.mxu0 0
    %181 = vmatpush1.bf16.msra.mxu0 0
    %182 = vmatprep.subr.bf16.mxu0 0
    %183 = vmatpush1.bf16.msra.mxu0 0
    %184 = vmatprep.subr.bf16.mxu0 0
    %185 = vmatpush1.bf16.msra.mxu0 0
    %186 = vmatprep.subr.bf16.mxu0 0
    %187 = vmatpush1.bf16.msra.mxu0 0
    %188 = vmatprep.subr.bf16.mxu0 0
    %189 = vmatpush1.bf16.msra.mxu0 0
    %190 = vmatprep.subr.bf16.mxu0 0
    %191 = vmatpush1.bf16.msra.mxu0 0
    %192 = vmatprep.subr.bf16.mxu0 0
    %193 = vmatpush1.bf16.msra.mxu0 0
    %194 = vmatprep.subr.bf16.mxu0 0
    %195 = vmatpush1.bf16.msra.mxu0 0
    %196 = vmatprep.mubr.bf16.mxu0 0
    %197 = vmatmul.mubr.bf16.gmra.mrb[0].mxu0 %v162
    %v198 = vpop.f32.mrb[0].mxu0
    %v199 = vadd.f32 %v140, %v198
    %v200 = vpop.f32.mrb[0].mxu0
    %v201 = vpop.f32.mrb[0].mxu0
    %v202 = vpop.f32.mrb[0].mxu0
    %203 = vdwg.mxu0
    %v208 = vunpack.c.l.b16 %v107
    %v209 = vunpack.c.l.b16 %v108
    %v210 = vunpack.c.l.b16 %v109
    %v211 = vunpack.c.l.b16 %v110
    %v212 = vpack.c.b16 %v209, %v208
    %v213 = vpack.c.b16 %v211, %v210
    %vm216 = vcmask 261120
    %v218 = vsel %vm216, 0, 0
    %220 = vmatprep.subr.bf16.mxu0 0
    %221 = vmatpush1.bf16.msra.mxu0 %v212
    %222 = vmatprep.subr.bf16.mxu0 0
    %223 = vmatpush1.bf16.msra.mxu0 %v213
    %224 = vmatprep.subr.bf16.mxu0 0
    %225 = vmatpush1.bf16.msra.mxu0 0
    %226 = vmatprep.subr.bf16.mxu0 0
    %227 = vmatpush1.bf16.msra.mxu0 0
    %228 = vmatprep.subr.bf16.mxu0 0
    %229 = vmatpush1.bf16.msra.mxu0 0
    %230 = vmatprep.subr.bf16.mxu0 0
    %231 = vmatpush1.bf16.msra.mxu0 0
    %232 = vmatprep.subr.bf16.mxu0 0
    %233 = vmatpush1.bf16.msra.mxu0 0
    %234 = vmatprep.subr.bf16.mxu0 0
    %235 = vmatpush1.bf16.msra.mxu0 0
    %236 = vmatprep.subr.bf16.mxu0 0
    %237 = vmatpush1.bf16.msra.mxu0 0
    %238 = vmatprep.subr.bf16.mxu0 0
    %239 = vmatpush1.bf16.msra.mxu0 0
    %240 = vmatprep.subr.bf16.mxu0 0
    %241 = vmatpush1.bf16.msra.mxu0 0
    %242 = vmatprep.subr.bf16.mxu0 0
    %243 = vmatpush1.bf16.msra.mxu0 0
    %244 = vmatprep.subr.bf16.mxu0 0
    %245 = vmatpush1.bf16.msra.mxu0 0
    %246 = vmatprep.subr.bf16.mxu0 0
    %247 = vmatpush1.bf16.msra.mxu0 0
    %248 = vmatprep.subr.bf16.mxu0 0
    %249 = vmatpush1.bf16.msra.mxu0 0
    %250 = vmatprep.subr.bf16.mxu0 0
    %251 = vmatpush1.bf16.msra.mxu0 0
    %252 = vmatprep.mubr.bf16.mxu0 0
    %253 = vmatmul.mubr.bf16.gmra.mrb[0].mxu0 %v218
    %v254 = vpop.f32.mrb[0].mxu0
    %v255 = vadd.f32 0.0, %v254
    %v256 = vpop.f32.mrb[0].mxu0
    %v257 = vpop.f32.mrb[0].mxu0
    %v258 = vpop.f32.mrb[0].mxu0
    %259 = vdwg.mxu0
    %v260 = vadd.f32 %v199, %v255
    %v261 = vxor.u32 %v260, 2147483648
    %v262 = vmul.f32 %v261, 1.442695
    %v263 = vpow.pop %v262
    %v264 = vadd.f32 %v263, 1.0
    %v265 = vrcp.pop %v264
    %v266 = vmul.f32 1.0, %v265
    %v267 = vtanh.pop %v260
    %v268 = vmul.f32 %v266, 0.0
    %270 = vrot.lane.b32.xlu0 %v267, 64
    %v271 = vpop.permute.xlu0 %270
    %v273 = vmul.f32 %v266, %v271
    %275 = vrot.lane.b32.xlu0 %v273, 32
    %v276 = vpop.permute.xlu0 %275
    %v278 = vadd.f32 %v268, %v276
    %v279 = vtanh.pop %v278
    %281 = vrot.lane.b32.xlu0 %v279, 64
    %v282 = vpop.permute.xlu0 %281
    %v284 = vmul.f32 %v266, %v282
    %v285 = vpack.c.bf16 %v284, %v284
    %v287 = vlaneseq
    %v288 = vshrl.u32 %v287, 7
    %v289 = vsub.s32 0, %v288
    %v290 = vrot.slane %v115, %v289
    %293 = vrot.lane.b32.xlu0 %v285, 32
    %v294 = vpop.permute.xlu0 %293
    %v299 = vunpack.c.l.b16 %v111
    %v300 = vunpack.c.l.b16 %v112
    %v301 = vunpack.c.l.b16 %v113
    %v302 = vunpack.c.l.b16 %v114
    %v303 = vpack.c.b16 %v300, %v299
    %v304 = vpack.c.b16 %v302, %v301
    %v308 = vsel %vm216, %v294, 0
    %310 = vmatprep.subr.bf16.mxu0 0
    %311 = vmatpush1.bf16.msra.mxu0 %v303
    %312 = vmatprep.subr.bf16.mxu0 0
    %313 = vmatpush1.bf16.msra.mxu0 %v304
    %314 = vmatprep.subr.bf16.mxu0 0
    %315 = vmatpush1.bf16.msra.mxu0 0
    %316 = vmatprep.subr.bf16.mxu0 0
    %317 = vmatpush1.bf16.msra.mxu0 0
    %318 = vmatprep.subr.bf16.mxu0 0
    %319 = vmatpush1.bf16.msra.mxu0 0
    %320 = vmatprep.subr.bf16.mxu0 0
    %321 = vmatpush1.bf16.msra.mxu0 0
    %322 = vmatprep.subr.bf16.mxu0 0
    %323 = vmatpush1.bf16.msra.mxu0 0
    %324 = vmatprep.subr.bf16.mxu0 0
    %325 = vmatpush1.bf16.msra.mxu0 0
    %326 = vmatprep.subr.bf16.mxu0 0
    %327 = vmatpush1.bf16.msra.mxu0 0
    %328 = vmatprep.subr.bf16.mxu0 0
    %329 = vmatpush1.bf16.msra.mxu0 0
    %330 = vmatprep.subr.bf16.mxu0 0
    %331 = vmatpush1.bf16.msra.mxu0 0
    %332 = vmatprep.subr.bf16.mxu0 0
    %333 = vmatpush1.bf16.msra.mxu0 0
    %334 = vmatprep.subr.bf16.mxu0 0
    %335 = vmatpush1.bf16.msra.mxu0 0
    %336 = vmatprep.subr.bf16.mxu0 0
    %337 = vmatpush1.bf16.msra.mxu0 0
    %338 = vmatprep.subr.bf16.mxu0 0
    %339 = vmatpush1.bf16.msra.mxu0 0
    %340 = vmatprep.subr.bf16.mxu0 0
    %341 = vmatpush1.bf16.msra.mxu0 0
    %342 = vmatprep.mubr.bf16.mxu0 0
    %343 = vmatmul.mubr.bf16.gmra.mrb[0].mxu0 %v308
    %v344 = vpop.f32.mrb[0].mxu0
    %v345 = vadd.f32 %v290, %v344
    %v346 = vpop.f32.mrb[0].mxu0
    %v347 = vpop.f32.mrb[0].mxu0
    %v348 = vpop.f32.mrb[0].mxu0
    %349 = vdwg.mxu0
    %v354 = vunpack.c.l.b16 %v116
    %v355 = vunpack.c.l.b16 %v117
    %v356 = vunpack.c.l.b16 %v118
    %v357 = vunpack.c.l.b16 %v119
    %v358 = vpack.c.b16 %v355, %v354
    %v359 = vpack.c.b16 %v357, %v356
    %362 = vmatprep.subr.bf16.mxu0 0
    %363 = vmatpush1.bf16.msra.mxu0 %v358
    %364 = vmatprep.subr.bf16.mxu0 0
    %365 = vmatpush1.bf16.msra.mxu0 %v359
    %366 = vmatprep.subr.bf16.mxu0 0
    %367 = vmatpush1.bf16.msra.mxu0 0
    %368 = vmatprep.subr.bf16.mxu0 0
    %369 = vmatpush1.bf16.msra.mxu0 0
    %370 = vmatprep.subr.bf16.mxu0 0
    %371 = vmatpush1.bf16.msra.mxu0 0
    %372 = vmatprep.subr.bf16.mxu0 0
    %373 = vmatpush1.bf16.msra.mxu0 0
    %374 = vmatprep.subr.bf16.mxu0 0
    %375 = vmatpush1.bf16.msra.mxu0 0
    %376 = vmatprep.subr.bf16.mxu0 0
    %377 = vmatpush1.bf16.msra.mxu0 0
    %378 = vmatprep.subr.bf16.mxu0 0
    %379 = vmatpush1.bf16.msra.mxu0 0
    %380 = vmatprep.subr.bf16.mxu0 0
    %381 = vmatpush1.bf16.msra.mxu0 0
    %382 = vmatprep.subr.bf16.mxu0 0
    %383 = vmatpush1.bf16.msra.mxu0 0
    %384 = vmatprep.subr.bf16.mxu0 0
    %385 = vmatpush1.bf16.msra.mxu0 0
    %386 = vmatprep.subr.bf16.mxu0 0
    %387 = vmatpush1.bf16.msra.mxu0 0
    %388 = vmatprep.subr.bf16.mxu0 0
    %389 = vmatpush1.bf16.msra.mxu0 0
    %390 = vmatprep.subr.bf16.mxu0 0
    %391 = vmatpush1.bf16.msra.mxu0 0
    %392 = vmatprep.subr.bf16.mxu0 0
    %393 = vmatpush1.bf16.msra.mxu0 0
    %394 = vmatprep.mubr.bf16.mxu0 0
    %395 = vmatmul.mubr.bf16.gmra.mrb[0].mxu0 %v218
    %v396 = vpop.f32.mrb[0].mxu0
    %v397 = vadd.f32 0.0, %v396
    %v398 = vpop.f32.mrb[0].mxu0
    %v399 = vpop.f32.mrb[0].mxu0
    %v400 = vpop.f32.mrb[0].mxu0
    %401 = vdwg.mxu0
    %v402 = vadd.f32 %v345, %v397
    %v403 = vxor.u32 %v402, 2147483648
    %v404 = vmul.f32 %v403, 1.442695
    %v405 = vpow.pop %v404
    %v406 = vadd.f32 %v405, 1.0
    %v407 = vrcp.pop %v406
    %v408 = vmul.f32 1.0, %v407
    %v409 = vtanh.pop %v402
    %v410 = vmul.f32 %v408, 0.0
    %412 = vrot.lane.b32.xlu0 %v409, 64
    %v413 = vpop.permute.xlu0 %412
    %v415 = vmul.f32 %v408, %v413
    %417 = vrot.lane.b32.xlu0 %v415, 32
    %v418 = vpop.permute.xlu0 %417
    %v420 = vadd.f32 %v410, %v418
    %v421 = vtanh.pop %v420
    %423 = vrot.lane.b32.xlu0 %v421, 64
    %v424 = vpop.permute.xlu0 %423
    %v426 = vmul.f32 %v408, %v424
    %v427 = vpack.c.bf16 %v426, %v426
    %s428 = sadd.s32 %s124, 1
    %s429 = sld [smem:[#allocation2 + %s428]]
    %s430 = sadd.s32 %s124, 9
    %s431 = sld [smem:[#allocation2 + %s430]]
    %v432 = vstv %s431
    %v433 = vstv %s429
    %v434 = vsel %vm126, %v432, %v433
    %vm435 = vcmp.eq.s32.totalorder %v121, %v434
    %v436 = vsel %vm435, 1, 0
    %v437 = vcvt.s32.f32 %v436
    %v438 = vpack.c.bf16 %v437, %v437
    %v440 = vsel %vm160, %v438, 0
    %442 = vmatprep.subr.bf16.mxu0 0
    %443 = vmatpush1.bf16.msra.mxu0 %v154
    %444 = vmatprep.subr.bf16.mxu0 0
    %445 = vmatpush1.bf16.msra.mxu0 %v155
    %446 = vmatprep.subr.bf16.mxu0 0
    %447 = vmatpush1.bf16.msra.mxu0 %v156
    %448 = vmatprep.subr.bf16.mxu0 0
    %449 = vmatpush1.bf16.msra.mxu0 0
    %450 = vmatprep.subr.bf16.mxu0 0
    %451 = vmatpush1.bf16.msra.mxu0 0
    %452 = vmatprep.subr.bf16.mxu0 0
    %453 = vmatpush1.bf16.msra.mxu0 0
    %454 = vmatprep.subr.bf16.mxu0 0
    %455 = vmatpush1.bf16.msra.mxu0 0
    %456 = vmatprep.subr.bf16.mxu0 0
    %457 = vmatpush1.bf16.msra.mxu0 0
    %458 = vmatprep.subr.bf16.mxu0 0
    %459 = vmatpush1.bf16.msra.mxu0 0
    %460 = vmatprep.subr.bf16.mxu0 0
    %461 = vmatpush1.bf16.msra.mxu0 0
    %462 = vmatprep.subr.bf16.mxu0 0
    %463 = vmatpush1.bf16.msra.mxu0 0
    %464 = vmatprep.subr.bf16.mxu0 0
    %465 = vmatpush1.bf16.msra.mxu0 0
    %466 = vmatprep.subr.bf16.mxu0 0
    %467 = vmatpush1.bf16.msra.mxu0 0
    %468 = vmatprep.subr.bf16.mxu0 0
    %469 = vmatpush1.bf16.msra.mxu0 0
    %470 = vmatprep.subr.bf16.mxu0 0
    %471 = vmatpush1.bf16.msra.mxu0 0
    %472 = vmatprep.subr.bf16.mxu0 0
    %473 = vmatpush1.bf16.msra.mxu0 0
    %474 = vmatprep.mubr.bf16.mxu0 0
    %475 = vmatmul.mubr.bf16.gmra.mrb[0].mxu0 %v440
    %v476 = vpop.f32.mrb[0].mxu0
    %v477 = vadd.f32 %v140, %v476
    %v478 = vpop.f32.mrb[0].mxu0
    %v479 = vpop.f32.mrb[0].mxu0
    %v480 = vpop.f32.mrb[0].mxu0
    %481 = vdwg.mxu0
    %482 = vmatprep.subr.bf16.mxu0 0
    %483 = vmatpush1.bf16.msra.mxu0 %v212
    %484 = vmatprep.subr.bf16.mxu0 0
    %485 = vmatpush1.bf16.msra.mxu0 %v213
    %486 = vmatprep.subr.bf16.mxu0 0
    %487 = vmatpush1.bf16.msra.mxu0 0
    %488 = vmatprep.subr.bf16.mxu0 0
    %489 = vmatpush1.bf16.msra.mxu0 0
    %490 = vmatprep.subr.bf16.mxu0 0
    %491 = vmatpush1.bf16.msra.mxu0 0
    %492 = vmatprep.subr.bf16.mxu0 0
    %493 = vmatpush1.bf16.msra.mxu0 0
    %494 = vmatprep.subr.bf16.mxu0 0
    %495 = vmatpush1.bf16.msra.mxu0 0
    %496 = vmatprep.subr.bf16.mxu0 0
    %497 = vmatpush1.bf16.msra.mxu0 0
    %498 = vmatprep.subr.bf16.mxu0 0
    %499 = vmatpush1.bf16.msra.mxu0 0
    %500 = vmatprep.subr.bf16.mxu0 0
    %501 = vmatpush1.bf16.msra.mxu0 0
    %502 = vmatprep.subr.bf16.mxu0 0
    %503 = vmatpush1.bf16.msra.mxu0 0
    %504 = vmatprep.subr.bf16.mxu0 0
    %505 = vmatpush1.bf16.msra.mxu0 0
    %506 = vmatprep.subr.bf16.mxu0 0
    %507 = vmatpush1.bf16.msra.mxu0 0
    %508 = vmatprep.subr.bf16.mxu0 0
    %509 = vmatpush1.bf16.msra.mxu0 0
    %510 = vmatprep.subr.bf16.mxu0 0
    %511 = vmatpush1.bf16.msra.mxu0 0
    %512 = vmatprep.subr.bf16.mxu0 0
    %513 = vmatpush1.bf16.msra.mxu0 0
    %514 = vmatprep.mubr.bf16.mxu0 0
    %515 = vmatmul.mubr.bf16.gmra.mrb[0].mxu0 %v308
    %v516 = vpop.f32.mrb[0].mxu0
    %v517 = vadd.f32 0.0, %v516
    %v518 = vpop.f32.mrb[0].mxu0
    %v519 = vpop.f32.mrb[0].mxu0
    %v520 = vpop.f32.mrb[0].mxu0
    %521 = vdwg.mxu0
    %v522 = vadd.f32 %v477, %v517
    %v523 = vxor.u32 %v522, 2147483648
    %v524 = vmul.f32 %v523, 1.442695
    %v525 = vpow.pop %v524
    %v526 = vadd.f32 %v525, 1.0
    %v527 = vrcp.pop %v526
    %v528 = vmul.f32 1.0, %v527
    %v529 = vtanh.pop %v522
    %v530 = vmul.f32 %v528, %v278
    %532 = vrot.lane.b32.xlu0 %v529, 64
    %v533 = vpop.permute.xlu0 %532
    %v535 = vmul.f32 %v528, %v533
    %537 = vrot.lane.b32.xlu0 %v535, 32
    %v538 = vpop.permute.xlu0 %537
    %v540 = vadd.f32 %v530, %v538
    %v541 = vtanh.pop %v540
    %543 = vrot.lane.b32.xlu0 %v541, 64
    %v544 = vpop.permute.xlu0 %543
    %v546 = vmul.f32 %v528, %v544
    %v547 = vpack.c.bf16 %v546, %v546
    %549 = vrot.lane.b32.xlu0 %v547, 32
    %v550 = vpop.permute.xlu0 %549
    %v552 = vsel %vm216, %v550, 0
    %554 = vmatprep.subr.bf16.mxu0 0
    %555 = vmatpush1.bf16.msra.mxu0 %v303
    %556 = vmatprep.subr.bf16.mxu0 0
    %557 = vmatpush1.bf16.msra.mxu0 %v304
    %558 = vmatprep.subr.bf16.mxu0 0
    %559 = vmatpush1.bf16.msra.mxu0 0
    %560 = vmatprep.subr.bf16.mxu0 0
    %561 = vmatpush1.bf16.msra.mxu0 0
    %562 = vmatprep.subr.bf16.mxu0 0
    %563 = vmatpush1.bf16.msra.mxu0 0
    %564 = vmatprep.subr.bf16.mxu0 0
    %565 = vmatpush1.bf16.msra.mxu0 0
    %566 = vmatprep.subr.bf16.mxu0 0
    %567 = vmatpush1.bf16.msra.mxu0 0
    %568 = vmatprep.subr.bf16.mxu0 0
    %569 = vmatpush1.bf16.msra.mxu0 0
    %570 = vmatprep.subr.bf16.mxu0 0
    %571 = vmatpush1.bf16.msra.mxu0 0
    %572 = vmatprep.subr.bf16.mxu0 0
    %573 = vmatpush1.bf16.msra.mxu0 0
    %574 = vmatprep.subr.bf16.mxu0 0
    %575 = vmatpush1.bf16.msra.mxu0 0
    %576 = vmatprep.subr.bf16.mxu0 0
    %577 = vmatpush1.bf16.msra.mxu0 0
    %578 = vmatprep.subr.bf16.mxu0 0
    %579 = vmatpush1.bf16.msra.mxu0 0
    %580 = vmatprep.subr.bf16.mxu0 0
    %581 = vmatpush1.bf16.msra.mxu0 0
    %582 = vmatprep.subr.bf16.mxu0 0
    %583 = vmatpush1.bf16.msra.mxu0 0
    %584 = vmatprep.subr.bf16.mxu0 0
    %585 = vmatpush1.bf16.msra.mxu0 0
    %586 = vmatprep.mubr.bf16.mxu0 0
    %587 = vmatmul.mubr.bf16.gmra.mrb[0].mxu0 %v552
    %v588 = vpop.f32.mrb[0].mxu0
    %v589 = vadd.f32 %v290, %v588
    %v590 = vpop.f32.mrb[0].mxu0
    %v591 = vpop.f32.mrb[0].mxu0
    %v592 = vpop.f32.mrb[0].mxu0
    %593 = vdwg.mxu0
    %595 = vrot.lane.b32.xlu0 %v427, 32
    %v596 = vpop.permute.xlu0 %595
    %v598 = vsel %vm216, %v596, 0
    %600 = vmatprep.subr.bf16.mxu0 0
    %601 = vmatpush1.bf16.msra.mxu0 %v358
    %602 = vmatprep.subr.bf16.mxu0 0
    %603 = vmatpush1.bf16.msra.mxu0 %v359
    %604 = vmatprep.subr.bf16.mxu0 0
    %605 = vmatpush1.bf16.msra.mxu0 0
    %606 = vmatprep.subr.bf16.mxu0 0
    %607 = vmatpush1.bf16.msra.mxu0 0
    %608 = vmatprep.subr.bf16.mxu0 0
    %609 = vmatpush1.bf16.msra.mxu0 0
    %610 = vmatprep.subr.bf16.mxu0 0
    %611 = vmatpush1.bf16.msra.mxu0 0
    %612 = vmatprep.subr.bf16.mxu0 0
    %613 = vmatpush1.bf16.msra.mxu0 0
    %614 = vmatprep.subr.bf16.mxu0 0
    %615 = vmatpush1.bf16.msra.mxu0 0
    %616 = vmatprep.subr.bf16.mxu0 0
    %617 = vmatpush1.bf16.msra.mxu0 0
    %618 = vmatprep.subr.bf16.mxu0 0
    %619 = vmatpush1.bf16.msra.mxu0 0
    %620 = vmatprep.subr.bf16.mxu0 0
    %621 = vmatpush1.bf16.msra.mxu0 0
    %622 = vmatprep.subr.bf16.mxu0 0
    %623 = vmatpush1.bf16.msra.mxu0 0
    %624 = vmatprep.subr.bf16.mxu0 0
    %625 = vmatpush1.bf16.msra.mxu0 0
    %626 = vmatprep.subr.bf16.mxu0 0
    %627 = vmatpush1.bf16.msra.mxu0 0
    %628 = vmatprep.subr.bf16.mxu0 0
    %629 = vmatpush1.bf16.msra.mxu0 0
    %630 = vmatprep.subr.bf16.mxu0 0
    %631 = vmatpush1.bf16.msra.mxu0 0
    %632 = vmatprep.mubr.bf16.mxu0 0
    %633 = vmatmul.mubr.bf16.gmra.mrb[0].mxu0 %v598
    %v634 = vpop.f32.mrb[0].mxu0
    %v635 = vadd.f32 0.0, %v634
    %v636 = vpop.f32.mrb[0].mxu0
    %v637 = vpop.f32.mrb[0].mxu0
    %v638 = vpop.f32.mrb[0].mxu0
    %639 = vdwg.mxu0
    %v640 = vadd.f32 %v589, %v635
    %v641 = vxor.u32 %v640, 2147483648
    %v642 = vmul.f32 %v641, 1.442695
    %v643 = vpow.pop %v642
    %v644 = vadd.f32 %v643, 1.0
    %v645 = vrcp.pop %v644
    %v646 = vmul.f32 1.0, %v645
    %v647 = vtanh.pop %v640
    %v648 = vmul.f32 %v646, %v420
    %650 = vrot.lane.b32.xlu0 %v647, 64
    %v651 = vpop.permute.xlu0 %650
    %v653 = vmul.f32 %v646, %v651
    %655 = vrot.lane.b32.xlu0 %v653, 32
    %v656 = vpop.permute.xlu0 %655
    %v658 = vadd.f32 %v648, %v656
    %v659 = vtanh.pop %v658
    %661 = vrot.lane.b32.xlu0 %v659, 64
    %v662 = vpop.permute.xlu0 %661
    %v664 = vmul.f32 %v646, %v662
    %v665 = vpack.c.bf16 %v664, %v664
    %s666 = sadd.s32 %s124, 2
    %s667 = sld [smem:[#allocation2 + %s666]]
    %s668 = sadd.s32 %s124, 10
    %s669 = sld [smem:[#allocation2 + %s668]]
    %v670 = vstv %s669
    %v671 = vstv %s667
    %v672 = vsel %vm126, %v670, %v671
    %vm673 = vcmp.eq.s32.totalorder %v121, %v672
    %v674 = vsel %vm673, 1, 0
    %v675 = vcvt.s32.f32 %v674
    %v676 = vpack.c.bf16 %v675, %v675
    %v678 = vsel %vm160, %v676, 0
    %680 = vmatprep.subr.bf16.mxu0 0
    %681 = vmatpush1.bf16.msra.mxu0 %v154
    %682 = vmatprep.subr.bf16.mxu0 0
    %683 = vmatpush1.bf16.msra.mxu0 %v155
    %684 = vmatprep.subr.bf16.mxu0 0
    %685 = vmatpush1.bf16.msra.mxu0 %v156
    %686 = vmatprep.subr.bf16.mxu0 0
    %687 = vmatpush1.bf16.msra.mxu0 0
    %688 = vmatprep.subr.bf16.mxu0 0
    %689 = vmatpush1.bf16.msra.mxu0 0
    %690 = vmatprep.subr.bf16.mxu0 0
    %691 = vmatpush1.bf16.msra.mxu0 0
    %692 = vmatprep.subr.bf16.mxu0 0
    %693 = vmatpush1.bf16.msra.mxu0 0
    %694 = vmatprep.subr.bf16.mxu0 0
    %695 = vmatpush1.bf16.msra.mxu0 0
    %696 = vmatprep.subr.bf16.mxu0 0
    %697 = vmatpush1.bf16.msra.mxu0 0
    %698 = vmatprep.subr.bf16.mxu0 0
    %699 = vmatpush1.bf16.msra.mxu0 0
    %700 = vmatprep.subr.bf16.mxu0 0
    %701 = vmatpush1.bf16.msra.mxu0 0
    %702 = vmatprep.subr.bf16.mxu0 0
    %703 = vmatpush1.bf16.msra.mxu0 0
    %704 = vmatprep.subr.bf16.mxu0 0
    %705 = vmatpush1.bf16.msra.mxu0 0
    %706 = vmatprep.subr.bf16.mxu0 0
    %707 = vmatpush1.bf16.msra.mxu0 0
    %708 = vmatprep.subr.bf16.mxu0 0
    %709 = vmatpush1.bf16.msra.mxu0 0
    %710 = vmatprep.subr.bf16.mxu0 0
    %711 = vmatpush1.bf16.msra.mxu0 0
    %712 = vmatprep.mubr.bf16.mxu0 0
    %713 = vmatmul.mubr.bf16.gmra.mrb[0].mxu0 %v678
    %v714 = vpop.f32.mrb[0].mxu0
    %v715 = vadd.f32 %v140, %v714
    %v716 = vpop.f32.mrb[0].mxu0
    %v717 = vpop.f32.mrb[0].mxu0
    %v718 = vpop.f32.mrb[0].mxu0
    %719 = vdwg.mxu0
    %720 = vmatprep.subr.bf16.mxu0 0
    %721 = vmatpush1.bf16.msra.mxu0 %v212
    %722 = vmatprep.subr.bf16.mxu0 0
    %723 = vmatpush1.bf16.msra.mxu0 %v213
    %724 = vmatprep.subr.bf16.mxu0 0
    %725 = vmatpush1.bf16.msra.mxu0 0
    %726 = vmatprep.subr.bf16.mxu0 0
    %727 = vmatpush1.bf16.msra.mxu0 0
    %728 = vmatprep.subr.bf16.mxu0 0
    %729 = vmatpush1.bf16.msra.mxu0 0
    %730 = vmatprep.subr.bf16.mxu0 0
    %731 = vmatpush1.bf16.msra.mxu0 0
    %732 = vmatprep.subr.bf16.mxu0 0
    %733 = vmatpush1.bf16.msra.mxu0 0
    %734 = vmatprep.subr.bf16.mxu0 0
    %735 = vmatpush1.bf16.msra.mxu0 0
    %736 = vmatprep.subr.bf16.mxu0 0
    %737 = vmatpush1.bf16.msra.mxu0 0
    %738 = vmatprep.subr.bf16.mxu0 0
    %739 = vmatpush1.bf16.msra.mxu0 0
    %740 = vmatprep.subr.bf16.mxu0 0
    %741 = vmatpush1.bf16.msra.mxu0 0
    %742 = vmatprep.subr.bf16.mxu0 0
    %743 = vmatpush1.bf16.msra.mxu0 0
    %744 = vmatprep.subr.bf16.mxu0 0
    %745 = vmatpush1.bf16.msra.mxu0 0
    %746 = vmatprep.subr.bf16.mxu0 0
    %747 = vmatpush1.bf16.msra.mxu0 0
    %748 = vmatprep.subr.bf16.mxu0 0
    %749 = vmatpush1.bf16.msra.mxu0 0
    %750 = vmatprep.subr.bf16.mxu0 0
    %751 = vmatpush1.bf16.msra.mxu0 0
    %752 = vmatprep.mubr.bf16.mxu0 0
    %753 = vmatmul.mubr.bf16.gmra.mrb[0].mxu0 %v552
    %v754 = vpop.f32.mrb[0].mxu0
    %v755 = vadd.f32 0.0, %v754
    %v756 = vpop.f32.mrb[0].mxu0
    %v757 = vpop.f32.mrb[0].mxu0
    %v758 = vpop.f32.mrb[0].mxu0
    %759 = vdwg.mxu0
    %v760 = vadd.f32 %v715, %v755
    %v761 = vxor.u32 %v760, 2147483648
    %v762 = vmul.f32 %v761, 1.442695
    %v763 = vpow.pop %v762
    %v764 = vadd.f32 %v763, 1.0
    %v765 = vrcp.pop %v764
    %v766 = vmul.f32 1.0, %v765
    %v767 = vtanh.pop %v760
    %v768 = vmul.f32 %v766, %v540
    %770 = vrot.lane.b32.xlu0 %v767, 64
    %v771 = vpop.permute.xlu0 %770
    %v773 = vmul.f32 %v766, %v771
    %775 = vrot.lane.b32.xlu0 %v773, 32
    %v776 = vpop.permute.xlu0 %775
    %v778 = vadd.f32 %v768, %v776
    %v779 = vtanh.pop %v778
    %781 = vrot.lane.b32.xlu0 %v779, 64
    %v782 = vpop.permute.xlu0 %781
    %v784 = vmul.f32 %v766, %v782
    %v785 = vpack.c.bf16 %v784, %v784
    %787 = vrot.lane.b32.xlu0 %v785, 32
    %v788 = vpop.permute.xlu0 %787
    %v790 = vsel %vm216, %v788, 0
    %792 = vmatprep.subr.bf16.mxu0 0
    %793 = vmatpush1.bf16.msra.mxu0 %v303
    %794 = vmatprep.subr.bf16.mxu0 0
    %795 = vmatpush1.bf16.msra.mxu0 %v304
    %796 = vmatprep.subr.bf16.mxu0 0
    %797 = vmatpush1.bf16.msra.mxu0 0
    %798 = vmatprep.subr.bf16.mxu0 0
    %799 = vmatpush1.bf16.msra.mxu0 0
    %800 = vmatprep.subr.bf16.mxu0 0
    %801 = vmatpush1.bf16.msra.mxu0 0
    %802 = vmatprep.subr.bf16.mxu0 0
    %803 = vmatpush1.bf16.msra.mxu0 0
    %804 = vmatprep.subr.bf16.mxu0 0
    %805 = vmatpush1.bf16.msra.mxu0 0
    %806 = vmatprep.subr.bf16.mxu0 0
    %807 = vmatpush1.bf16.msra.mxu0 0
    %808 = vmatprep.subr.bf16.mxu0 0
    %809 = vmatpush1.bf16.msra.mxu0 0
    %810 = vmatprep.subr.bf16.mxu0 0
    %811 = vmatpush1.bf16.msra.mxu0 0
    %812 = vmatprep.subr.bf16.mxu0 0
    %813 = vmatpush1.bf16.msra.mxu0 0
    %814 = vmatprep.subr.bf16.mxu0 0
    %815 = vmatpush1.bf16.msra.mxu0 0
    %816 = vmatprep.subr.bf16.mxu0 0
    %817 = vmatpush1.bf16.msra.mxu0 0
    %818 = vmatprep.subr.bf16.mxu0 0
    %819 = vmatpush1.bf16.msra.mxu0 0
    %820 = vmatprep.subr.bf16.mxu0 0
    %821 = vmatpush1.bf16.msra.mxu0 0
    %822 = vmatprep.subr.bf16.mxu0 0
    %823 = vmatpush1.bf16.msra.mxu0 0
    %824 = vmatprep.mubr.bf16.mxu0 0
    %825 = vmatmul.mubr.bf16.gmra.mrb[0].mxu0 %v790
    %v826 = vpop.f32.mrb[0].mxu0
    %v827 = vadd.f32 %v290, %v826
    %v828 = vpop.f32.mrb[0].mxu0
    %v829 = vpop.f32.mrb[0].mxu0
    %v830 = vpop.f32.mrb[0].mxu0
    %831 = vdwg.mxu0
    %833 = vrot.lane.b32.xlu0 %v665, 32
    %v834 = vpop.permute.xlu0 %833
    %v836 = vsel %vm216, %v834, 0
    %838 = vmatprep.subr.bf16.mxu0 0
    %839 = vmatpush1.bf16.msra.mxu0 %v358
    %840 = vmatprep.subr.bf16.mxu0 0
    %841 = vmatpush1.bf16.msra.mxu0 %v359
    %842 = vmatprep.subr.bf16.mxu0 0
    %843 = vmatpush1.bf16.msra.mxu0 0
    %844 = vmatprep.subr.bf16.mxu0 0
    %845 = vmatpush1.bf16.msra.mxu0 0
    %846 = vmatprep.subr.bf16.mxu0 0
    %847 = vmatpush1.bf16.msra.mxu0 0
    %848 = vmatprep.subr.bf16.mxu0 0
    %849 = vmatpush1.bf16.msra.mxu0 0
    %850 = vmatprep.subr.bf16.mxu0 0
    %851 = vmatpush1.bf16.msra.mxu0 0
    %852 = vmatprep.subr.bf16.mxu0 0
    %853 = vmatpush1.bf16.msra.mxu0 0
    %854 = vmatprep.subr.bf16.mxu0 0
    %855 = vmatpush1.bf16.msra.mxu0 0
    %856 = vmatprep.subr.bf16.mxu0 0
    %857 = vmatpush1.bf16.msra.mxu0 0
    %858 = vmatprep.subr.bf16.mxu0 0
    %859 = vmatpush1.bf16.msra.mxu0 0
    %860 = vmatprep.subr.bf16.mxu0 0
    %861 = vmatpush1.bf16.msra.mxu0 0
    %862 = vmatprep.subr.bf16.mxu0 0
    %863 = vmatpush1.bf16.msra.mxu0 0
    %864 = vmatprep.subr.bf16.mxu0 0
    %865 = vmatpush1.bf16.msra.mxu0 0
    %866 = vmatprep.subr.bf16.mxu0 0
    %867 = vmatpush1.bf16.msra.mxu0 0
    %868 = vmatprep.subr.bf16.mxu0 0
    %869 = vmatpush1.bf16.msra.mxu0 0
    %870 = vmatprep.mubr.bf16.mxu0 0
    %871 = vmatmul.mubr.bf16.gmra.mrb[0].mxu0 %v836
    %v872 = vpop.f32.mrb[0].mxu0
    %v873 = vadd.f32 0.0, %v872
    %v874 = vpop.f32.mrb[0].mxu0
    %v875 = vpop.f32.mrb[0].mxu0
    %v876 = vpop.f32.mrb[0].mxu0
    %877 = vdwg.mxu0
    %v878 = vadd.f32 %v827, %v873
    %v879 = vxor.u32 %v878, 2147483648
    %v880 = vmul.f32 %v879, 1.442695
    %v881 = vpow.pop %v880
    %v882 = vadd.f32 %v881, 1.0
    %v883 = vrcp.pop %v882
    %v884 = vmul.f32 1.0, %v883
    %v885 = vtanh.pop %v878
    %v886 = vmul.f32 %v884, %v658
    %888 = vrot.lane.b32.xlu0 %v885, 64
    %v889 = vpop.permute.xlu0 %888
    %v891 = vmul.f32 %v884, %v889
    %893 = vrot.lane.b32.xlu0 %v891, 32
    %v894 = vpop.permute.xlu0 %893
    %v896 = vadd.f32 %v886, %v894
    %v897 = vtanh.pop %v896
    %899 = vrot.lane.b32.xlu0 %v897, 64
    %v900 = vpop.permute.xlu0 %899
    %v902 = vmul.f32 %v884, %v900
    %v903 = vpack.c.bf16 %v902, %v902
    %s904 = sadd.s32 %s124, 3
    %s905 = sld [smem:[#allocation2 + %s904]]
    %s906 = sadd.s32 %s124, 11
    %s907 = sld [smem:[#allocation2 + %s906]]
    %v908 = vstv %s907
    %v909 = vstv %s905
    %v910 = vsel %vm126, %v908, %v909
    %vm911 = vcmp.eq.s32.totalorder %v121, %v910
    %v912 = vsel %vm911, 1, 0
    %v913 = vcvt.s32.f32 %v912
    %v914 = vpack.c.bf16 %v913, %v913
    %v916 = vsel %vm160, %v914, 0
    %918 = vmatprep.subr.bf16.mxu0 0
    %919 = vmatpush1.bf16.msra.mxu0 %v154
    %920 = vmatprep.subr.bf16.mxu0 0
    %921 = vmatpush1.bf16.msra.mxu0 %v155
    %922 = vmatprep.subr.bf16.mxu0 0
    %923 = vmatpush1.bf16.msra.mxu0 %v156
    %924 = vmatprep.subr.bf16.mxu0 0
    %925 = vmatpush1.bf16.msra.mxu0 0
    %926 = vmatprep.subr.bf16.mxu0 0
    %927 = vmatpush1.bf16.msra.mxu0 0
    %928 = vmatprep.subr.bf16.mxu0 0
    %929 = vmatpush1.bf16.msra.mxu0 0
    %930 = vmatprep.subr.bf16.mxu0 0
    %931 = vmatpush1.bf16.msra.mxu0 0
    %932 = vmatprep.subr.bf16.mxu0 0
    %933 = vmatpush1.bf16.msra.mxu0 0
    %934 = vmatprep.subr.bf16.mxu0 0
    %935 = vmatpush1.bf16.msra.mxu0 0
    %936 = vmatprep.subr.bf16.mxu0 0
    %937 = vmatpush1.bf16.msra.mxu0 0
    %938 = vmatprep.subr.bf16.mxu0 0
    %939 = vmatpush1.bf16.msra.mxu0 0
    %940 = vmatprep.subr.bf16.mxu0 0
    %941 = vmatpush1.bf16.msra.mxu0 0
    %942 = vmatprep.subr.bf16.mxu0 0
    %943 = vmatpush1.bf16.msra.mxu0 0
    %944 = vmatprep.subr.bf16.mxu0 0
    %945 = vmatpush1.bf16.msra.mxu0 0
    %946 = vmatprep.subr.bf16.mxu0 0
    %947 = vmatpush1.bf16.msra.mxu0 0
    %948 = vmatprep.subr.bf16.mxu0 0
    %949 = vmatpush1.bf16.msra.mxu0 0
    %950 = vmatprep.mubr.bf16.mxu0 0
    %951 = vmatmul.mubr.bf16.gmra.mrb[0].mxu0 %v916
    %v952 = vpop.f32.mrb[0].mxu0
    %v953 = vadd.f32 %v140, %v952
    %v954 = vpop.f32.mrb[0].mxu0
    %v955 = vpop.f32.mrb[0].mxu0
    %v956 = vpop.f32.mrb[0].mxu0
    %957 = vdwg.mxu0
    %958 = vmatprep.subr.bf16.mxu0 0
    %959 = vmatpush1.bf16.msra.mxu0 %v212
    %960 = vmatprep.subr.bf16.mxu0 0
    %961 = vmatpush1.bf16.msra.mxu0 %v213
    %962 = vmatprep.subr.bf16.mxu0 0
    %963 = vmatpush1.bf16.msra.mxu0 0
    %964 = vmatprep.subr.bf16.mxu0 0
    %965 = vmatpush1.bf16.msra.mxu0 0
    %966 = vmatprep.subr.bf16.mxu0 0
    %967 = vmatpush1.bf16.msra.mxu0 0
    %968 = vmatprep.subr.bf16.mxu0 0
    %969 = vmatpush1.bf16.msra.mxu0 0
    %970 = vmatprep.subr.bf16.mxu0 0
    %971 = vmatpush1.bf16.msra.mxu0 0
    %972 = vmatprep.subr.bf16.mxu0 0
    %973 = vmatpush1.bf16.msra.mxu0 0
    %974 = vmatprep.subr.bf16.mxu0 0
    %975 = vmatpush1.bf16.msra.mxu0 0
    %976 = vmatprep.subr.bf16.mxu0 0
    %977 = vmatpush1.bf16.msra.mxu0 0
    %978 = vmatprep.subr.bf16.mxu0 0
    %979 = vmatpush1.bf16.msra.mxu0 0
    %980 = vmatprep.subr.bf16.mxu0 0
    %981 = vmatpush1.bf16.msra.mxu0 0
    %982 = vmatprep.subr.bf16.mxu0 0
    %983 = vmatpush1.bf16.msra.mxu0 0
    %984 = vmatprep.subr.bf16.mxu0 0
    %985 = vmatpush1.bf16.msra.mxu0 0
    %986 = vmatprep.subr.bf16.mxu0 0
    %987 = vmatpush1.bf16.msra.mxu0 0
    %988 = vmatprep.subr.bf16.mxu0 0
    %989 = vmatpush1.bf16.msra.mxu0 0
    %990 = vmatprep.mubr.bf16.mxu0 0
    %991 = vmatmul.mubr.bf16.gmra.mrb[0].mxu0 %v790
    %v992 = vpop.f32.mrb[0].mxu0
    %v993 = vadd.f32 0.0, %v992
    %v994 = vpop.f32.mrb[0].mxu0
    %v995 = vpop.f32.mrb[0].mxu0
    %v996 = vpop.f32.mrb[0].mxu0
    %997 = vdwg.mxu0
    %v998 = vadd.f32 %v953, %v993
    %v999 = vxor.u32 %v998, 2147483648
    %v1000 = vmul.f32 %v999, 1.442695
    %v1001 = vpow.pop %v1000
    %v1002 = vadd.f32 %v1001, 1.0
    %v1003 = vrcp.pop %v1002
    %v1004 = vmul.f32 1.0, %v1003
    %v1005 = vtanh.pop %v998
    %v1006 = vmul.f32 %v1004, %v778
    %1008 = vrot.lane.b32.xlu0 %v1005, 64
    %v1009 = vpop.permute.xlu0 %1008
    %v1011 = vmul.f32 %v1004, %v1009
    %1013 = vrot.lane.b32.xlu0 %v1011, 32
    %v1014 = vpop.permute.xlu0 %1013
    %v1016 = vadd.f32 %v1006, %v1014
    %v1017 = vtanh.pop %v1016
    %1019 = vrot.lane.b32.xlu0 %v1017, 64
    %v1020 = vpop.permute.xlu0 %1019
    %v1022 = vmul.f32 %v1004, %v1020
    %v1023 = vpack.c.bf16 %v1022, %v1022
    %1025 = vrot.lane.b32.xlu0 %v1023, 32
    %v1026 = vpop.permute.xlu0 %1025
    %v1028 = vsel %vm216, %v1026, 0
    %1030 = vmatprep.subr.bf16.mxu0 0
    %1031 = vmatpush1.bf16.msra.mxu0 %v303
    %1032 = vmatprep.subr.bf16.mxu0 0
    %1033 = vmatpush1.bf16.msra.mxu0 %v304
    %1034 = vmatprep.subr.bf16.mxu0 0
    %1035 = vmatpush1.bf16.msra.mxu0 0
    %1036 = vmatprep.subr.bf16.mxu0 0
    %1037 = vmatpush1.bf16.msra.mxu0 0
    %1038 = vmatprep.subr.bf16.mxu0 0
    %1039 = vmatpush1.bf16.msra.mxu0 0
    %1040 = vmatprep.subr.bf16.mxu0 0
    %1041 = vmatpush1.bf16.msra.mxu0 0
    %1042 = vmatprep.subr.bf16.mxu0 0
    %1043 = vmatpush1.bf16.msra.mxu0 0
    %1044 = vmatprep.subr.bf16.mxu0 0
    %1045 = vmatpush1.bf16.msra.mxu0 0
    %1046 = vmatprep.subr.bf16.mxu0 0
    %1047 = vmatpush1.bf16.msra.mxu0 0
    %1048 = vmatprep.subr.bf16.mxu0 0
    %1049 = vmatpush1.bf16.msra.mxu0 0
    %1050 = vmatprep.subr.bf16.mxu0 0
    %1051 = vmatpush1.bf16.msra.mxu0 0
    %1052 = vmatprep.subr.bf16.mxu0 0
    %1053 = vmatpush1.bf16.msra.mxu0 0
    %1054 = vmatprep.subr.bf16.mxu0 0
    %1055 = vmatpush1.bf16.msra.mxu0 0
    %1056 = vmatprep.subr.bf16.mxu0 0
    %1057 = vmatpush1.bf16.msra.mxu0 0
    %1058 = vmatprep.subr.bf16.mxu0 0
    %1059 = vmatpush1.bf16.msra.mxu0 0
    %1060 = vmatprep.subr.bf16.mxu0 0
    %1061 = vmatpush1.bf16.msra.mxu0 0
    %1062 = vmatprep.mubr.bf16.mxu0 0
    %1063 = vmatmul.mubr.bf16.gmra.mrb[0].mxu0 %v1028
    %v1064 = vpop.f32.mrb[0].mxu0
    %v1065 = vadd.f32 %v290, %v1064
    %v1066 = vpop.f32.mrb[0].mxu0
    %v1067 = vpop.f32.mrb[0].mxu0
    %v1068 = vpop.f32.mrb[0].mxu0
    %1069 = vdwg.mxu0
    %1071 = vrot.lane.b32.xlu0 %v903, 32
    %v1072 = vpop.permute.xlu0 %1071
    %v1074 = vsel %vm216, %v1072, 0
    %1076 = vmatprep.subr.bf16.mxu0 0
    %1077 = vmatpush1.bf16.msra.mxu0 %v358
    %1078 = vmatprep.subr.bf16.mxu0 0
    %1079 = vmatpush1.bf16.msra.mxu0 %v359
    %1080 = vmatprep.subr.bf16.mxu0 0
    %1081 = vmatpush1.bf16.msra.mxu0 0
    %1082 = vmatprep.subr.bf16.mxu0 0
    %1083 = vmatpush1.bf16.msra.mxu0 0
    %1084 = vmatprep.subr.bf16.mxu0 0
    %1085 = vmatpush1.bf16.msra.mxu0 0
    %1086 = vmatprep.subr.bf16.mxu0 0
    %1087 = vmatpush1.bf16.msra.mxu0 0
    %1088 = vmatprep.subr.bf16.mxu0 0
    %1089 = vmatpush1.bf16.msra.mxu0 0
    %1090 = vmatprep.subr.bf16.mxu0 0
    %1091 = vmatpush1.bf16.msra.mxu0 0
    %1092 = vmatprep.subr.bf16.mxu0 0
    %1093 = vmatpush1.bf16.msra.mxu0 0
    %1094 = vmatprep.subr.bf16.mxu0 0
    %1095 = vmatpush1.bf16.msra.mxu0 0
    %1096 = vmatprep.subr.bf16.mxu0 0
    %1097 = vmatpush1.bf16.msra.mxu0 0
    %1098 = vmatprep.subr.bf16.mxu0 0
    %1099 = vmatpush1.bf16.msra.mxu0 0
    %1100 = vmatprep.subr.bf16.mxu0 0
    %1101 = vmatpush1.bf16.msra.mxu0 0
    %1102 = vmatprep.subr.bf16.mxu0 0
    %1103 = vmatpush1.bf16.msra.mxu0 0
    %1104 = vmatprep.subr.bf16.mxu0 0
    %1105 = vmatpush1.bf16.msra.mxu0 0
    %1106 = vmatprep.subr.bf16.mxu0 0
    %1107 = vmatpush1.bf16.msra.mxu0 0
    %1108 = vmatprep.mubr.bf16.mxu0 0
    %1109 = vmatmul.mubr.bf16.gmra.mrb[0].mxu0 %v1074
    %v1110 = vpop.f32.mrb[0].mxu0
    %v1111 = vadd.f32 0.0, %v1110
    %v1112 = vpop.f32.mrb[0].mxu0
    %v1113 = vpop.f32.mrb[0].mxu0
    %v1114 = vpop.f32.mrb[0].mxu0
    %1115 = vdwg.mxu0
    %v1116 = vadd.f32 %v1065, %v1111
    %v1117 = vxor.u32 %v1116, 2147483648
    %v1118 = vmul.f32 %v1117, 1.442695
    %v1119 = vpow.pop %v1118
    %v1120 = vadd.f32 %v1119, 1.0
    %v1121 = vrcp.pop %v1120
    %v1122 = vmul.f32 1.0, %v1121
    %v1123 = vtanh.pop %v1116
    %v1124 = vmul.f32 %v1122, %v896
    %1126 = vrot.lane.b32.xlu0 %v1123, 64
    %v1127 = vpop.permute.xlu0 %1126
    %v1129 = vmul.f32 %v1122, %v1127
    %1131 = vrot.lane.b32.xlu0 %v1129, 32
    %v1132 = vpop.permute.xlu0 %1131
    %v1134 = vadd.f32 %v1124, %v1132
    %v1135 = vtanh.pop %v1134
    %1137 = vrot.lane.b32.xlu0 %v1135, 64
    %v1138 = vpop.permute.xlu0 %1137
    %v1140 = vmul.f32 %v1122, %v1138
    %v1141 = vpack.c.bf16 %v1140, %v1140
    %s1142 = sadd.s32 %s124, 4
    %s1143 = sld [smem:[#allocation2 + %s1142]]
    %s1144 = sadd.s32 %s124, 12
    %s1145 = sld [smem:[#allocation2 + %s1144]]
    %v1146 = vstv %s1145
    %v1147 = vstv %s1143
    %v1148 = vsel %vm126, %v1146, %v1147
    %vm1149 = vcmp.eq.s32.totalorder %v121, %v1148
    %v1150 = vsel %vm1149, 1, 0
    %v1151 = vcvt.s32.f32 %v1150
    %v1152 = vpack.c.bf16 %v1151, %v1151
    %v1154 = vsel %vm160, %v1152, 0
    %1156 = vmatprep.subr.bf16.mxu0 0
    %1157 = vmatpush1.bf16.msra.mxu0 %v154
    %1158 = vmatprep.subr.bf16.mxu0 0
    %1159 = vmatpush1.bf16.msra.mxu0 %v155
    %1160 = vmatprep.subr.bf16.mxu0 0
    %1161 = vmatpush1.bf16.msra.mxu0 %v156
    %1162 = vmatprep.subr.bf16.mxu0 0
    %1163 = vmatpush1.bf16.msra.mxu0 0
    %1164 = vmatprep.subr.bf16.mxu0 0
    %1165 = vmatpush1.bf16.msra.mxu0 0
    %1166 = vmatprep.subr.bf16.mxu0 0
    %1167 = vmatpush1.bf16.msra.mxu0 0
    %1168 = vmatprep.subr.bf16.mxu0 0
    %1169 = vmatpush1.bf16.msra.mxu0 0
    %1170 = vmatprep.subr.bf16.mxu0 0
    %1171 = vmatpush1.bf16.msra.mxu0 0
    %1172 = vmatprep.subr.bf16.mxu0 0
    %1173 = vmatpush1.bf16.msra.mxu0 0
    %1174 = vmatprep.subr.bf16.mxu0 0
    %1175 = vmatpush1.bf16.msra.mxu0 0
    %1176 = vmatprep.subr.bf16.mxu0 0
    %1177 = vmatpush1.bf16.msra.mxu0 0
    %1178 = vmatprep.subr.bf16.mxu0 0
    %1179 = vmatpush1.bf16.msra.mxu0 0
    %1180 = vmatprep.subr.bf16.mxu0 0
    %1181 = vmatpush1.bf16.msra.mxu0 0
    %1182 = vmatprep.subr.bf16.mxu0 0
    %1183 = vmatpush1.bf16.msra.mxu0 0
    %1184 = vmatprep.subr.bf16.mxu0 0
    %1185 = vmatpush1.bf16.msra.mxu0 0
    %1186 = vmatprep.subr.bf16.mxu0 0
    %1187 = vmatpush1.bf16.msra.mxu0 0
    %1188 = vmatprep.mubr.bf16.mxu0 0
    %1189 = vmatmul.mubr.bf16.gmra.mrb[0].mxu0 %v1154
    %v1190 = vpop.f32.mrb[0].mxu0
    %v1191 = vadd.f32 %v140, %v1190
    %v1192 = vpop.f32.mrb[0].mxu0
    %v1193 = vpop.f32.mrb[0].mxu0
    %v1194 = vpop.f32.mrb[0].mxu0
    %1195 = vdwg.mxu0
    %1196 = vmatprep.subr.bf16.mxu0 0
    %1197 = vmatpush1.bf16.msra.mxu0 %v212
    %1198 = vmatprep.subr.bf16.mxu0 0
    %1199 = vmatpush1.bf16.msra.mxu0 %v213
    %1200 = vmatprep.subr.bf16.mxu0 0
    %1201 = vmatpush1.bf16.msra.mxu0 0
    %1202 = vmatprep.subr.bf16.mxu0 0
    %1203 = vmatpush1.bf16.msra.mxu0 0
    %1204 = vmatprep.subr.bf16.mxu0 0
    %1205 = vmatpush1.bf16.msra.mxu0 0
    %1206 = vmatprep.subr.bf16.mxu0 0
    %1207 = vmatpush1.bf16.msra.mxu0 0
    %1208 = vmatprep.subr.bf16.mxu0 0
    %1209 = vmatpush1.bf16.msra.mxu0 0
    %1210 = vmatprep.subr.bf16.mxu0 0
    %1211 = vmatpush1.bf16.msra.mxu0 0
    %1212 = vmatprep.subr.bf16.mxu0 0
    %1213 = vmatpush1.bf16.msra.mxu0 0
    %1214 = vmatprep.subr.bf16.mxu0 0
    %1215 = vmatpush1.bf16.msra.mxu0 0
    %1216 = vmatprep.subr.bf16.mxu0 0
    %1217 = vmatpush1.bf16.msra.mxu0 0
    %1218 = vmatprep.subr.bf16.mxu0 0
    %1219 = vmatpush1.bf16.msra.mxu0 0
    %1220 = vmatprep.subr.bf16.mxu0 0
    %1221 = vmatpush1.bf16.msra.mxu0 0
    %1222 = vmatprep.subr.bf16.mxu0 0
    %1223 = vmatpush1.bf16.msra.mxu0 0
    %1224 = vmatprep.subr.bf16.mxu0 0
    %1225 = vmatpush1.bf16.msra.mxu0 0
    %1226 = vmatprep.subr.bf16.mxu0 0
    %1227 = vmatpush1.bf16.msra.mxu0 0
    %1228 = vmatprep.mubr.bf16.mxu0 0
    %1229 = vmatmul.mubr.bf16.gmra.mrb[0].mxu0 %v1028
    %v1230 = vpop.f32.mrb[0].mxu0
    %v1231 = vadd.f32 0.0, %v1230
    %v1232 = vpop.f32.mrb[0].mxu0
    %v1233 = vpop.f32.mrb[0].mxu0
    %v1234 = vpop.f32.mrb[0].mxu0
    %1235 = vdwg.mxu0
    %v1236 = vadd.f32 %v1191, %v1231
    %v1237 = vxor.u32 %v1236, 2147483648
    %v1238 = vmul.f32 %v1237, 1.442695
    %v1239 = vpow.pop %v1238
    %v1240 = vadd.f32 %v1239, 1.0
    %v1241 = vrcp.pop %v1240
    %v1242 = vmul.f32 1.0, %v1241
    %v1243 = vtanh.pop %v1236
    %v1244 = vmul.f32 %v1242, %v1016
    %1246 = vrot.lane.b32.xlu0 %v1243, 64
    %v1247 = vpop.permute.xlu0 %1246
    %v1249 = vmul.f32 %v1242, %v1247
    %1251 = vrot.lane.b32.xlu0 %v1249, 32
    %v1252 = vpop.permute.xlu0 %1251
    %v1254 = vadd.f32 %v1244, %v1252
    %v1255 = vtanh.pop %v1254
    %1257 = vrot.lane.b32.xlu0 %v1255, 64
    %v1258 = vpop.permute.xlu0 %1257
    %v1260 = vmul.f32 %v1242, %v1258
    %v1261 = vpack.c.bf16 %v1260, %v1260
    %1263 = vrot.lane.b32.xlu0 %v1261, 32
    %v1264 = vpop.permute.xlu0 %1263
    %v1266 = vsel %vm216, %v1264, 0
    %1268 = vmatprep.subr.bf16.mxu0 0
    %1269 = vmatpush1.bf16.msra.mxu0 %v303
    %1270 = vmatprep.subr.bf16.mxu0 0
    %1271 = vmatpush1.bf16.msra.mxu0 %v304
    %1272 = vmatprep.subr.bf16.mxu0 0
    %1273 = vmatpush1.bf16.msra.mxu0 0
    %1274 = vmatprep.subr.bf16.mxu0 0
    %1275 = vmatpush1.bf16.msra.mxu0 0
    %1276 = vmatprep.subr.bf16.mxu0 0
    %1277 = vmatpush1.bf16.msra.mxu0 0
    %1278 = vmatprep.subr.bf16.mxu0 0
    %1279 = vmatpush1.bf16.msra.mxu0 0
    %1280 = vmatprep.subr.bf16.mxu0 0
    %1281 = vmatpush1.bf16.msra.mxu0 0
    %1282 = vmatprep.subr.bf16.mxu0 0
    %1283 = vmatpush1.bf16.msra.mxu0 0
    %1284 = vmatprep.subr.bf16.mxu0 0
    %1285 = vmatpush1.bf16.msra.mxu0 0
    %1286 = vmatprep.subr.bf16.mxu0 0
    %1287 = vmatpush1.bf16.msra.mxu0 0
    %1288 = vmatprep.subr.bf16.mxu0 0
    %1289 = vmatpush1.bf16.msra.mxu0 0
    %1290 = vmatprep.subr.bf16.mxu0 0
    %1291 = vmatpush1.bf16.msra.mxu0 0
    %1292 = vmatprep.subr.bf16.mxu0 0
    %1293 = vmatpush1.bf16.msra.mxu0 0
    %1294 = vmatprep.subr.bf16.mxu0 0
    %1295 = vmatpush1.bf16.msra.mxu0 0
    %1296 = vmatprep.subr.bf16.mxu0 0
    %1297 = vmatpush1.bf16.msra.mxu0 0
    %1298 = vmatprep.subr.bf16.mxu0 0
    %1299 = vmatpush1.bf16.msra.mxu0 0
    %1300 = vmatprep.mubr.bf16.mxu0 0
    %1301 = vmatmul.mubr.bf16.gmra.mrb[0].mxu0 %v1266
    %v1302 = vpop.f32.mrb[0].mxu0
    %v1303 = vadd.f32 %v290, %v1302
    %v1304 = vpop.f32.mrb[0].mxu0
    %v1305 = vpop.f32.mrb[0].mxu0
    %v1306 = vpop.f32.mrb[0].mxu0
    %1307 = vdwg.mxu0
    %1309 = vrot.lane.b32.xlu0 %v1141, 32
    %v1310 = vpop.permute.xlu0 %1309
    %v1312 = vsel %vm216, %v1310, 0
    %1314 = vmatprep.subr.bf16.mxu0 0
    %1315 = vmatpush1.bf16.msra.mxu0 %v358
    %1316 = vmatprep.subr.bf16.mxu0 0
    %1317 = vmatpush1.bf16.msra.mxu0 %v359
    %1318 = vmatprep.subr.bf16.mxu0 0
    %1319 = vmatpush1.bf16.msra.mxu0 0
    %1320 = vmatprep.subr.bf16.mxu0 0
    %1321 = vmatpush1.bf16.msra.mxu0 0
    %1322 = vmatprep.subr.bf16.mxu0 0
    %1323 = vmatpush1.bf16.msra.mxu0 0
    %1324 = vmatprep.subr.bf16.mxu0 0
    %1325 = vmatpush1.bf16.msra.mxu0 0
    %1326 = vmatprep.subr.bf16.mxu0 0
    %1327 = vmatpush1.bf16.msra.mxu0 0
    %1328 = vmatprep.subr.bf16.mxu0 0
    %1329 = vmatpush1.bf16.msra.mxu0 0
    %1330 = vmatprep.subr.bf16.mxu0 0
    %1331 = vmatpush1.bf16.msra.mxu0 0
    %1332 = vmatprep.subr.bf16.mxu0 0
    %1333 = vmatpush1.bf16.msra.mxu0 0
    %1334 = vmatprep.subr.bf16.mxu0 0
    %1335 = vmatpush1.bf16.msra.mxu0 0
    %1336 = vmatprep.subr.bf16.mxu0 0
    %1337 = vmatpush1.bf16.msra.mxu0 0
    %1338 = vmatprep.subr.bf16.mxu0 0
    %1339 = vmatpush1.bf16.msra.mxu0 0
    %1340 = vmatprep.subr.bf16.mxu0 0
    %1341 = vmatpush1.bf16.msra.mxu0 0
    %1342 = vmatprep.subr.bf16.mxu0 0
    %1343 = vmatpush1.bf16.msra.mxu0 0
    %1344 = vmatprep.subr.bf16.mxu0 0
    %1345 = vmatpush1.bf16.msra.mxu0 0
    %1346 = vmatprep.mubr.bf16.mxu0 0
    %1347 = vmatmul.mubr.bf16.gmra.mrb[0].mxu0 %v1312
    %v1348 = vpop.f32.mrb[0].mxu0
    %v1349 = vadd.f32 0.0, %v1348
    %v1350 = vpop.f32.mrb[0].mxu0
    %v1351 = vpop.f32.mrb[0].mxu0
    %v1352 = vpop.f32.mrb[0].mxu0
    %1353 = vdwg.mxu0
    %v1354 = vadd.f32 %v1303, %v1349
    %v1355 = vxor.u32 %v1354, 2147483648
    %v1356 = vmul.f32 %v1355, 1.442695
    %v1357 = vpow.pop %v1356
    %v1358 = vadd.f32 %v1357, 1.0
    %v1359 = vrcp.pop %v1358
    %v1360 = vmul.f32 1.0, %v1359
    %v1361 = vtanh.pop %v1354
    %v1362 = vmul.f32 %v1360, %v1134
    %1364 = vrot.lane.b32.xlu0 %v1361, 64
    %v1365 = vpop.permute.xlu0 %1364
    %v1367 = vmul.f32 %v1360, %v1365
    %1369 = vrot.lane.b32.xlu0 %v1367, 32
    %v1370 = vpop.permute.xlu0 %1369
    %v1372 = vadd.f32 %v1362, %v1370
    %v1373 = vtanh.pop %v1372
    %1375 = vrot.lane.b32.xlu0 %v1373, 64
    %v1376 = vpop.permute.xlu0 %1375
    %v1378 = vmul.f32 %v1360, %v1376
    %v1379 = vpack.c.bf16 %v1378, %v1378
    %s1380 = sadd.s32 %s124, 5
    %s1381 = sld [smem:[#allocation2 + %s1380]]
    %s1382 = sadd.s32 %s124, 13
    %s1383 = sld [smem:[#allocation2 + %s1382]]
    %v1384 = vstv %s1383
    %v1385 = vstv %s1381
    %v1386 = vsel %vm126, %v1384, %v1385
    %vm1387 = vcmp.eq.s32.totalorder %v121, %v1386
    %v1388 = vsel %vm1387, 1, 0
    %v1389 = vcvt.s32.f32 %v1388
    %v1390 = vpack.c.bf16 %v1389, %v1389
    %v1392 = vsel %vm160, %v1390, 0
    %1394 = vmatprep.subr.bf16.mxu0 0
    %1395 = vmatpush1.bf16.msra.mxu0 %v154
    %1396 = vmatprep.subr.bf16.mxu0 0
    %1397 = vmatpush1.bf16.msra.mxu0 %v155
    %1398 = vmatprep.subr.bf16.mxu0 0
    %1399 = vmatpush1.bf16.msra.mxu0 %v156
    %1400 = vmatprep.subr.bf16.mxu0 0
    %1401 = vmatpush1.bf16.msra.mxu0 0
    %1402 = vmatprep.subr.bf16.mxu0 0
    %1403 = vmatpush1.bf16.msra.mxu0 0
    %1404 = vmatprep.subr.bf16.mxu0 0
    %1405 = vmatpush1.bf16.msra.mxu0 0
    %1406 = vmatprep.subr.bf16.mxu0 0
    %1407 = vmatpush1.bf16.msra.mxu0 0
    %1408 = vmatprep.subr.bf16.mxu0 0
    %1409 = vmatpush1.bf16.msra.mxu0 0
    %1410 = vmatprep.subr.bf16.mxu0 0
    %1411 = vmatpush1.bf16.msra.mxu0 0
    %1412 = vmatprep.subr.bf16.mxu0 0
    %1413 = vmatpush1.bf16.msra.mxu0 0
    %1414 = vmatprep.subr.bf16.mxu0 0
    %1415 = vmatpush1.bf16.msra.mxu0 0
    %1416 = vmatprep.subr.bf16.mxu0 0
    %1417 = vmatpush1.bf16.msra.mxu0 0
    %1418 = vmatprep.subr.bf16.mxu0 0
    %1419 = vmatpush1.bf16.msra.mxu0 0
    %1420 = vmatprep.subr.bf16.mxu0 0
    %1421 = vmatpush1.bf16.msra.mxu0 0
    %1422 = vmatprep.subr.bf16.mxu0 0
    %1423 = vmatpush1.bf16.msra.mxu0 0
    %1424 = vmatprep.subr.bf16.mxu0 0
    %1425 = vmatpush1.bf16.msra.mxu0 0
    %1426 = vmatprep.mubr.bf16.mxu0 0
    %1427 = vmatmul.mubr.bf16.gmra.mrb[0].mxu0 %v1392
    %v1428 = vpop.f32.mrb[0].mxu0
    %v1429 = vadd.f32 %v140, %v1428
    %v1430 = vpop.f32.mrb[0].mxu0
    %v1431 = vpop.f32.mrb[0].mxu0
    %v1432 = vpop.f32.mrb[0].mxu0
    %1433 = vdwg.mxu0
    %1434 = vmatprep.subr.bf16.mxu0 0
    %1435 = vmatpush1.bf16.msra.mxu0 %v212
    %1436 = vmatprep.subr.bf16.mxu0 0
    %1437 = vmatpush1.bf16.msra.mxu0 %v213
    %1438 = vmatprep.subr.bf16.mxu0 0
    %1439 = vmatpush1.bf16.msra.mxu0 0
    %1440 = vmatprep.subr.bf16.mxu0 0
    %1441 = vmatpush1.bf16.msra.mxu0 0
    %1442 = vmatprep.subr.bf16.mxu0 0
    %1443 = vmatpush1.bf16.msra.mxu0 0
    %1444 = vmatprep.subr.bf16.mxu0 0
    %1445 = vmatpush1.bf16.msra.mxu0 0
    %1446 = vmatprep.subr.bf16.mxu0 0
    %1447 = vmatpush1.bf16.msra.mxu0 0
    %1448 = vmatprep.subr.bf16.mxu0 0
    %1449 = vmatpush1.bf16.msra.mxu0 0
    %1450 = vmatprep.subr.bf16.mxu0 0
    %1451 = vmatpush1.bf16.msra.mxu0 0
    %1452 = vmatprep.subr.bf16.mxu0 0
    %1453 = vmatpush1.bf16.msra.mxu0 0
    %1454 = vmatprep.subr.bf16.mxu0 0
    %1455 = vmatpush1.bf16.msra.mxu0 0
    %1456 = vmatprep.subr.bf16.mxu0 0
    %1457 = vmatpush1.bf16.msra.mxu0 0
    %1458 = vmatprep.subr.bf16.mxu0 0
    %1459 = vmatpush1.bf16.msra.mxu0 0
    %1460 = vmatprep.subr.bf16.mxu0 0
    %1461 = vmatpush1.bf16.msra.mxu0 0
    %1462 = vmatprep.subr.bf16.mxu0 0
    %1463 = vmatpush1.bf16.msra.mxu0 0
    %1464 = vmatprep.subr.bf16.mxu0 0
    %1465 = vmatpush1.bf16.msra.mxu0 0
    %1466 = vmatprep.mubr.bf16.mxu0 0
    %1467 = vmatmul.mubr.bf16.gmra.mrb[0].mxu0 %v1266
    %v1468 = vpop.f32.mrb[0].mxu0
    %v1469 = vadd.f32 0.0, %v1468
    %v1470 = vpop.f32.mrb[0].mxu0
    %v1471 = vpop.f32.mrb[0].mxu0
    %v1472 = vpop.f32.mrb[0].mxu0
    %1473 = vdwg.mxu0
    %v1474 = vadd.f32 %v1429, %v1469
    %v1475 = vxor.u32 %v1474, 2147483648
    %v1476 = vmul.f32 %v1475, 1.442695
    %v1477 = vpow.pop %v1476
    %v1478 = vadd.f32 %v1477, 1.0
    %v1479 = vrcp.pop %v1478
    %v1480 = vmul.f32 1.0, %v1479
    %v1481 = vtanh.pop %v1474
    %v1482 = vmul.f32 %v1480, %v1254
    %1484 = vrot.lane.b32.xlu0 %v1481, 64
    %v1485 = vpop.permute.xlu0 %1484
    %v1487 = vmul.f32 %v1480, %v1485
    %1489 = vrot.lane.b32.xlu0 %v1487, 32
    %v1490 = vpop.permute.xlu0 %1489
    %v1492 = vadd.f32 %v1482, %v1490
    %v1493 = vtanh.pop %v1492
    %1495 = vrot.lane.b32.xlu0 %v1493, 64
    %v1496 = vpop.permute.xlu0 %1495
    %v1498 = vmul.f32 %v1480, %v1496
    %v1499 = vpack.c.bf16 %v1498, %v1498
    %1501 = vrot.lane.b32.xlu0 %v1499, 32
    %v1502 = vpop.permute.xlu0 %1501
    %v1504 = vsel %vm216, %v1502, 0
    %1506 = vmatprep.subr.bf16.mxu0 0
    %1507 = vmatpush1.bf16.msra.mxu0 %v303
    %1508 = vmatprep.subr.bf16.mxu0 0
    %1509 = vmatpush1.bf16.msra.mxu0 %v304
    %1510 = vmatprep.subr.bf16.mxu0 0
    %1511 = vmatpush1.bf16.msra.mxu0 0
    %1512 = vmatprep.subr.bf16.mxu0 0
    %1513 = vmatpush1.bf16.msra.mxu0 0
    %1514 = vmatprep.subr.bf16.mxu0 0
    %1515 = vmatpush1.bf16.msra.mxu0 0
    %1516 = vmatprep.subr.bf16.mxu0 0
    %1517 = vmatpush1.bf16.msra.mxu0 0
    %1518 = vmatprep.subr.bf16.mxu0 0
    %1519 = vmatpush1.bf16.msra.mxu0 0
    %1520 = vmatprep.subr.bf16.mxu0 0
    %1521 = vmatpush1.bf16.msra.mxu0 0
    %1522 = vmatprep.subr.bf16.mxu0 0
    %1523 = vmatpush1.bf16.msra.mxu0 0
    %1524 = vmatprep.subr.bf16.mxu0 0
    %1525 = vmatpush1.bf16.msra.mxu0 0
    %1526 = vmatprep.subr.bf16.mxu0 0
    %1527 = vmatpush1.bf16.msra.mxu0 0
    %1528 = vmatprep.subr.bf16.mxu0 0
    %1529 = vmatpush1.bf16.msra.mxu0 0
    %1530 = vmatprep.subr.bf16.mxu0 0
    %1531 = vmatpush1.bf16.msra.mxu0 0
    %1532 = vmatprep.subr.bf16.mxu0 0
    %1533 = vmatpush1.bf16.msra.mxu0 0
    %1534 = vmatprep.subr.bf16.mxu0 0
    %1535 = vmatpush1.bf16.msra.mxu0 0
    %1536 = vmatprep.subr.bf16.mxu0 0
    %1537 = vmatpush1.bf16.msra.mxu0 0
    %1538 = vmatprep.mubr.bf16.mxu0 0
    %1539 = vmatmul.mubr.bf16.gmra.mrb[0].mxu0 %v1504
    %v1540 = vpop.f32.mrb[0].mxu0
    %v1541 = vadd.f32 %v290, %v1540
    %v1542 = vpop.f32.mrb[0].mxu0
    %v1543 = vpop.f32.mrb[0].mxu0
    %v1544 = vpop.f32.mrb[0].mxu0
    %1545 = vdwg.mxu0
    %1547 = vrot.lane.b32.xlu0 %v1379, 32
    %v1548 = vpop.permute.xlu0 %1547
    %v1550 = vsel %vm216, %v1548, 0
    %1552 = vmatprep.subr.bf16.mxu0 0
    %1553 = vmatpush1.bf16.msra.mxu0 %v358
    %1554 = vmatprep.subr.bf16.mxu0 0
    %1555 = vmatpush1.bf16.msra.mxu0 %v359
    %1556 = vmatprep.subr.bf16.mxu0 0
    %1557 = vmatpush1.bf16.msra.mxu0 0
    %1558 = vmatprep.subr.bf16.mxu0 0
    %1559 = vmatpush1.bf16.msra.mxu0 0
    %1560 = vmatprep.subr.bf16.mxu0 0
    %1561 = vmatpush1.bf16.msra.mxu0 0
    %1562 = vmatprep.subr.bf16.mxu0 0
    %1563 = vmatpush1.bf16.msra.mxu0 0
    %1564 = vmatprep.subr.bf16.mxu0 0
    %1565 = vmatpush1.bf16.msra.mxu0 0
    %1566 = vmatprep.subr.bf16.mxu0 0
    %1567 = vmatpush1.bf16.msra.mxu0 0
    %1568 = vmatprep.subr.bf16.mxu0 0
    %1569 = vmatpush1.bf16.msra.mxu0 0
    %1570 = vmatprep.subr.bf16.mxu0 0
    %1571 = vmatpush1.bf16.msra.mxu0 0
    %1572 = vmatprep.subr.bf16.mxu0 0
    %1573 = vmatpush1.bf16.msra.mxu0 0
    %1574 = vmatprep.subr.bf16.mxu0 0
    %1575 = vmatpush1.bf16.msra.mxu0 0
    %1576 = vmatprep.subr.bf16.mxu0 0
    %1577 = vmatpush1.bf16.msra.mxu0 0
    %1578 = vmatprep.subr.bf16.mxu0 0
    %1579 = vmatpush1.bf16.msra.mxu0 0
    %1580 = vmatprep.subr.bf16.mxu0 0
    %1581 = vmatpush1.bf16.msra.mxu0 0
    %1582 = vmatprep.subr.bf16.mxu0 0
    %1583 = vmatpush1.bf16.msra.mxu0 0
    %1584 = vmatprep.mubr.bf16.mxu0 0
    %1585 = vmatmul.mubr.bf16.gmra.mrb[0].mxu0 %v1550
    %v1586 = vpop.f32.mrb[0].mxu0
    %v1587 = vadd.f32 0.0, %v1586
    %v1588 = vpop.f32.mrb[0].mxu0
    %v1589 = vpop.f32.mrb[0].mxu0
    %v1590 = vpop.f32.mrb[0].mxu0
    %1591 = vdwg.mxu0
    %v1592 = vadd.f32 %v1541, %v1587
    %v1593 = vxor.u32 %v1592, 2147483648
    %v1594 = vmul.f32 %v1593, 1.442695
    %v1595 = vpow.pop %v1594
    %v1596 = vadd.f32 %v1595, 1.0
    %v1597 = vrcp.pop %v1596
    %v1598 = vmul.f32 1.0, %v1597
    %v1599 = vtanh.pop %v1592
    %v1600 = vmul.f32 %v1598, %v1372
    %1602 = vrot.lane.b32.xlu0 %v1599, 64
    %v1603 = vpop.permute.xlu0 %1602
    %v1605 = vmul.f32 %v1598, %v1603
    %1607 = vrot.lane.b32.xlu0 %v1605, 32
    %v1608 = vpop.permute.xlu0 %1607
    %v1610 = vadd.f32 %v1600, %v1608
    %v1611 = vtanh.pop %v1610
    %1613 = vrot.lane.b32.xlu0 %v1611, 64
    %v1614 = vpop.permute.xlu0 %1613
    %v1616 = vmul.f32 %v1598, %v1614
    %v1617 = vpack.c.bf16 %v1616, %v1616
    %s1618 = sadd.s32 %s124, 6
    %s1619 = sld [smem:[#allocation2 + %s1618]]
    %s1620 = sadd.s32 %s124, 14
    %s1621 = sld [smem:[#allocation2 + %s1620]]
    %v1622 = vstv %s1621
    %v1623 = vstv %s1619
    %v1624 = vsel %vm126, %v1622, %v1623
    %vm1625 = vcmp.eq.s32.totalorder %v121, %v1624
    %v1626 = vsel %vm1625, 1, 0
    %v1627 = vcvt.s32.f32 %v1626
    %v1628 = vpack.c.bf16 %v1627, %v1627
    %v1630 = vsel %vm160, %v1628, 0
    %1632 = vmatprep.subr.bf16.mxu0 0
    %1633 = vmatpush1.bf16.msra.mxu0 %v154
    %1634 = vmatprep.subr.bf16.mxu0 0
    %1635 = vmatpush1.bf16.msra.mxu0 %v155
    %1636 = vmatprep.subr.bf16.mxu0 0
    %1637 = vmatpush1.bf16.msra.mxu0 %v156
    %1638 = vmatprep.subr.bf16.mxu0 0
    %1639 = vmatpush1.bf16.msra.mxu0 0
    %1640 = vmatprep.subr.bf16.mxu0 0
    %1641 = vmatpush1.bf16.msra.mxu0 0
    %1642 = vmatprep.subr.bf16.mxu0 0
    %1643 = vmatpush1.bf16.msra.mxu0 0
    %1644 = vmatprep.subr.bf16.mxu0 0
    %1645 = vmatpush1.bf16.msra.mxu0 0
    %1646 = vmatprep.subr.bf16.mxu0 0
    %1647 = vmatpush1.bf16.msra.mxu0 0
    %1648 = vmatprep.subr.bf16.mxu0 0
    %1649 = vmatpush1.bf16.msra.mxu0 0
    %1650 = vmatprep.subr.bf16.mxu0 0
    %1651 = vmatpush1.bf16.msra.mxu0 0
    %1652 = vmatprep.subr.bf16.mxu0 0
    %1653 = vmatpush1.bf16.msra.mxu0 0
    %1654 = vmatprep.subr.bf16.mxu0 0
    %1655 = vmatpush1.bf16.msra.mxu0 0
    %1656 = vmatprep.subr.bf16.mxu0 0
    %1657 = vmatpush1.bf16.msra.mxu0 0
    %1658 = vmatprep.subr.bf16.mxu0 0
    %1659 = vmatpush1.bf16.msra.mxu0 0
    %1660 = vmatprep.subr.bf16.mxu0 0
    %1661 = vmatpush1.bf16.msra.mxu0 0
    %1662 = vmatprep.subr.bf16.mxu0 0
    %1663 = vmatpush1.bf16.msra.mxu0 0
    %1664 = vmatprep.mubr.bf16.mxu0 0
    %1665 = vmatmul.mubr.bf16.gmra.mrb[0].mxu0 %v1630
    %v1666 = vpop.f32.mrb[0].mxu0
    %v1667 = vadd.f32 %v140, %v1666
    %v1668 = vpop.f32.mrb[0].mxu0
    %v1669 = vpop.f32.mrb[0].mxu0
    %v1670 = vpop.f32.mrb[0].mxu0
    %1671 = vdwg.mxu0
    %1672 = vmatprep.subr.bf16.mxu0 0
    %1673 = vmatpush1.bf16.msra.mxu0 %v212
    %1674 = vmatprep.subr.bf16.mxu0 0
    %1675 = vmatpush1.bf16.msra.mxu0 %v213
    %1676 = vmatprep.subr.bf16.mxu0 0
    %1677 = vmatpush1.bf16.msra.mxu0 0
    %1678 = vmatprep.subr.bf16.mxu0 0
    %1679 = vmatpush1.bf16.msra.mxu0 0
    %1680 = vmatprep.subr.bf16.mxu0 0
    %1681 = vmatpush1.bf16.msra.mxu0 0
    %1682 = vmatprep.subr.bf16.mxu0 0
    %1683 = vmatpush1.bf16.msra.mxu0 0
    %1684 = vmatprep.subr.bf16.mxu0 0
    %1685 = vmatpush1.bf16.msra.mxu0 0
    %1686 = vmatprep.subr.bf16.mxu0 0
    %1687 = vmatpush1.bf16.msra.mxu0 0
    %1688 = vmatprep.subr.bf16.mxu0 0
    %1689 = vmatpush1.bf16.msra.mxu0 0
    %1690 = vmatprep.subr.bf16.mxu0 0
    %1691 = vmatpush1.bf16.msra.mxu0 0
    %1692 = vmatprep.subr.bf16.mxu0 0
    %1693 = vmatpush1.bf16.msra.mxu0 0
    %1694 = vmatprep.subr.bf16.mxu0 0
    %1695 = vmatpush1.bf16.msra.mxu0 0
    %1696 = vmatprep.subr.bf16.mxu0 0
    %1697 = vmatpush1.bf16.msra.mxu0 0
    %1698 = vmatprep.subr.bf16.mxu0 0
    %1699 = vmatpush1.bf16.msra.mxu0 0
    %1700 = vmatprep.subr.bf16.mxu0 0
    %1701 = vmatpush1.bf16.msra.mxu0 0
    %1702 = vmatprep.subr.bf16.mxu0 0
    %1703 = vmatpush1.bf16.msra.mxu0 0
    %1704 = vmatprep.mubr.bf16.mxu0 0
    %1705 = vmatmul.mubr.bf16.gmra.mrb[0].mxu0 %v1504
    %v1706 = vpop.f32.mrb[0].mxu0
    %v1707 = vadd.f32 0.0, %v1706
    %v1708 = vpop.f32.mrb[0].mxu0
    %v1709 = vpop.f32.mrb[0].mxu0
    %v1710 = vpop.f32.mrb[0].mxu0
    %1711 = vdwg.mxu0
    %v1712 = vadd.f32 %v1667, %v1707
    %v1713 = vxor.u32 %v1712, 2147483648
    %v1714 = vmul.f32 %v1713, 1.442695
    %v1715 = vpow.pop %v1714
    %v1716 = vadd.f32 %v1715, 1.0
    %v1717 = vrcp.pop %v1716
    %v1718 = vmul.f32 1.0, %v1717
    %v1719 = vtanh.pop %v1712
    %v1720 = vmul.f32 %v1718, %v1492
    %1722 = vrot.lane.b32.xlu0 %v1719, 64
    %v1723 = vpop.permute.xlu0 %1722
    %v1725 = vmul.f32 %v1718, %v1723
    %1727 = vrot.lane.b32.xlu0 %v1725, 32
    %v1728 = vpop.permute.xlu0 %1727
    %v1730 = vadd.f32 %v1720, %v1728
    %v1731 = vtanh.pop %v1730
    %1733 = vrot.lane.b32.xlu0 %v1731, 64
    %v1734 = vpop.permute.xlu0 %1733
    %v1736 = vmul.f32 %v1718, %v1734
    %v1737 = vpack.c.bf16 %v1736, %v1736
    %1739 = vrot.lane.b32.xlu0 %v1737, 32
    %v1740 = vpop.permute.xlu0 %1739
    %v1742 = vsel %vm216, %v1740, 0
    %1744 = vmatprep.subr.bf16.mxu0 0
    %1745 = vmatpush1.bf16.msra.mxu0 %v303
    %1746 = vmatprep.subr.bf16.mxu0 0
    %1747 = vmatpush1.bf16.msra.mxu0 %v304
    %1748 = vmatprep.subr.bf16.mxu0 0
    %1749 = vmatpush1.bf16.msra.mxu0 0
    %1750 = vmatprep.subr.bf16.mxu0 0
    %1751 = vmatpush1.bf16.msra.mxu0 0
    %1752 = vmatprep.subr.bf16.mxu0 0
    %1753 = vmatpush1.bf16.msra.mxu0 0
    %1754 = vmatprep.subr.bf16.mxu0 0
    %1755 = vmatpush1.bf16.msra.mxu0 0
    %1756 = vmatprep.subr.bf16.mxu0 0
    %1757 = vmatpush1.bf16.msra.mxu0 0
    %1758 = vmatprep.subr.bf16.mxu0 0
    %1759 = vmatpush1.bf16.msra.mxu0 0
    %1760 = vmatprep.subr.bf16.mxu0 0
    %1761 = vmatpush1.bf16.msra.mxu0 0
    %1762 = vmatprep.subr.bf16.mxu0 0
    %1763 = vmatpush1.bf16.msra.mxu0 0
    %1764 = vmatprep.subr.bf16.mxu0 0
    %1765 = vmatpush1.bf16.msra.mxu0 0
    %1766 = vmatprep.subr.bf16.mxu0 0
    %1767 = vmatpush1.bf16.msra.mxu0 0
    %1768 = vmatprep.subr.bf16.mxu0 0
    %1769 = vmatpush1.bf16.msra.mxu0 0
    %1770 = vmatprep.subr.bf16.mxu0 0
    %1771 = vmatpush1.bf16.msra.mxu0 0
    %1772 = vmatprep.subr.bf16.mxu0 0
    %1773 = vmatpush1.bf16.msra.mxu0 0
    %1774 = vmatprep.subr.bf16.mxu0 0
    %1775 = vmatpush1.bf16.msra.mxu0 0
    %1776 = vmatprep.mubr.bf16.mxu0 0
    %1777 = vmatmul.mubr.bf16.gmra.mrb[0].mxu0 %v1742
    %v1778 = vpop.f32.mrb[0].mxu0
    %v1779 = vadd.f32 %v290, %v1778
    %v1780 = vpop.f32.mrb[0].mxu0
    %v1781 = vpop.f32.mrb[0].mxu0
    %v1782 = vpop.f32.mrb[0].mxu0
    %1783 = vdwg.mxu0
    %1785 = vrot.lane.b32.xlu0 %v1617, 32
    %v1786 = vpop.permute.xlu0 %1785
    %v1788 = vsel %vm216, %v1786, 0
    %1790 = vmatprep.subr.bf16.mxu0 0
    %1791 = vmatpush1.bf16.msra.mxu0 %v358
    %1792 = vmatprep.subr.bf16.mxu0 0
    %1793 = vmatpush1.bf16.msra.mxu0 %v359
    %1794 = vmatprep.subr.bf16.mxu0 0
    %1795 = vmatpush1.bf16.msra.mxu0 0
    %1796 = vmatprep.subr.bf16.mxu0 0
    %1797 = vmatpush1.bf16.msra.mxu0 0
    %1798 = vmatprep.subr.bf16.mxu0 0
    %1799 = vmatpush1.bf16.msra.mxu0 0
    %1800 = vmatprep.subr.bf16.mxu0 0
    %1801 = vmatpush1.bf16.msra.mxu0 0
    %1802 = vmatprep.subr.bf16.mxu0 0
    %1803 = vmatpush1.bf16.msra.mxu0 0
    %1804 = vmatprep.subr.bf16.mxu0 0
    %1805 = vmatpush1.bf16.msra.mxu0 0
    %1806 = vmatprep.subr.bf16.mxu0 0
    %1807 = vmatpush1.bf16.msra.mxu0 0
    %1808 = vmatprep.subr.bf16.mxu0 0
    %1809 = vmatpush1.bf16.msra.mxu0 0
    %1810 = vmatprep.subr.bf16.mxu0 0
    %1811 = vmatpush1.bf16.msra.mxu0 0
    %1812 = vmatprep.subr.bf16.mxu0 0
    %1813 = vmatpush1.bf16.msra.mxu0 0
    %1814 = vmatprep.subr.bf16.mxu0 0
    %1815 = vmatpush1.bf16.msra.mxu0 0
    %1816 = vmatprep.subr.bf16.mxu0 0
    %1817 = vmatpush1.bf16.msra.mxu0 0
    %1818 = vmatprep.subr.bf16.mxu0 0
    %1819 = vmatpush1.bf16.msra.mxu0 0
    %1820 = vmatprep.subr.bf16.mxu0 0
    %1821 = vmatpush1.bf16.msra.mxu0 0
    %1822 = vmatprep.mubr.bf16.mxu0 0
    %1823 = vmatmul.mubr.bf16.gmra.mrb[0].mxu0 %v1788
    %v1824 = vpop.f32.mrb[0].mxu0
    %v1825 = vadd.f32 0.0, %v1824
    %v1826 = vpop.f32.mrb[0].mxu0
    %v1827 = vpop.f32.mrb[0].mxu0
    %v1828 = vpop.f32.mrb[0].mxu0
    %1829 = vdwg.mxu0
    %v1830 = vadd.f32 %v1779, %v1825
    %v1831 = vxor.u32 %v1830, 2147483648
    %v1832 = vmul.f32 %v1831, 1.442695
    %v1833 = vpow.pop %v1832
    %v1834 = vadd.f32 %v1833, 1.0
    %v1835 = vrcp.pop %v1834
    %v1836 = vmul.f32 1.0, %v1835
    %v1837 = vtanh.pop %v1830
    %v1838 = vmul.f32 %v1836, %v1610
    %1840 = vrot.lane.b32.xlu0 %v1837, 64
    %v1841 = vpop.permute.xlu0 %1840
    %v1843 = vmul.f32 %v1836, %v1841
    %1845 = vrot.lane.b32.xlu0 %v1843, 32
    %v1846 = vpop.permute.xlu0 %1845
    %v1848 = vadd.f32 %v1838, %v1846
    %v1849 = vtanh.pop %v1848
    %1851 = vrot.lane.b32.xlu0 %v1849, 64
    %v1852 = vpop.permute.xlu0 %1851
    %v1854 = vmul.f32 %v1836, %v1852
    %v1855 = vpack.c.bf16 %v1854, %v1854
    %s1856 = sadd.s32 %s124, 7
    %s1857 = sld [smem:[#allocation2 + %s1856]]
    %s1858 = sadd.s32 %s124, 15
    %s1859 = sld [smem:[#allocation2 + %s1858]]
    %v1860 = vstv %s1859
    %v1861 = vstv %s1857
    %v1862 = vsel %vm126, %v1860, %v1861
    %vm1863 = vcmp.eq.s32.totalorder %v121, %v1862
    %v1864 = vsel %vm1863, 1, 0
    %v1865 = vcvt.s32.f32 %v1864
    %v1866 = vpack.c.bf16 %v1865, %v1865
    %v1868 = vsel %vm160, %v1866, 0
    %1870 = vmatprep.subr.bf16.mxu0 0
    %1871 = vmatpush1.bf16.msra.mxu0 %v154
    %1872 = vmatprep.subr.bf16.mxu0 0
    %1873 = vmatpush1.bf16.msra.mxu0 %v155
    %1874 = vmatprep.subr.bf16.mxu0 0
    %1875 = vmatpush1.bf16.msra.mxu0 %v156
    %1876 = vmatprep.subr.bf16.mxu0 0
    %1877 = vmatpush1.bf16.msra.mxu0 0
    %1878 = vmatprep.subr.bf16.mxu0 0
    %1879 = vmatpush1.bf16.msra.mxu0 0
    %1880 = vmatprep.subr.bf16.mxu0 0
    %1881 = vmatpush1.bf16.msra.mxu0 0
    %1882 = vmatprep.subr.bf16.mxu0 0
    %1883 = vmatpush1.bf16.msra.mxu0 0
    %1884 = vmatprep.subr.bf16.mxu0 0
    %1885 = vmatpush1.bf16.msra.mxu0 0
    %1886 = vmatprep.subr.bf16.mxu0 0
    %1887 = vmatpush1.bf16.msra.mxu0 0
    %1888 = vmatprep.subr.bf16.mxu0 0
    %1889 = vmatpush1.bf16.msra.mxu0 0
    %1890 = vmatprep.subr.bf16.mxu0 0
    %1891 = vmatpush1.bf16.msra.mxu0 0
    %1892 = vmatprep.subr.bf16.mxu0 0
    %1893 = vmatpush1.bf16.msra.mxu0 0
    %1894 = vmatprep.subr.bf16.mxu0 0
    %1895 = vmatpush1.bf16.msra.mxu0 0
    %1896 = vmatprep.subr.bf16.mxu0 0
    %1897 = vmatpush1.bf16.msra.mxu0 0
    %1898 = vmatprep.subr.bf16.mxu0 0
    %1899 = vmatpush1.bf16.msra.mxu0 0
    %1900 = vmatprep.subr.bf16.mxu0 0
    %1901 = vmatpush1.bf16.msra.mxu0 0
    %1902 = vmatprep.mubr.bf16.mxu0 0
    %1903 = vmatmul.mubr.bf16.gmra.mrb[0].mxu0 %v1868
    %v1904 = vpop.f32.mrb[0].mxu0
    %v1905 = vadd.f32 %v140, %v1904
    %v1906 = vpop.f32.mrb[0].mxu0
    %v1907 = vpop.f32.mrb[0].mxu0
    %v1908 = vpop.f32.mrb[0].mxu0
    %1909 = vdwg.mxu0
    %1910 = vmatprep.subr.bf16.mxu0 0
    %1911 = vmatpush1.bf16.msra.mxu0 %v212
    %1912 = vmatprep.subr.bf16.mxu0 0
    %1913 = vmatpush1.bf16.msra.mxu0 %v213
    %1914 = vmatprep.subr.bf16.mxu0 0
    %1915 = vmatpush1.bf16.msra.mxu0 0
    %1916 = vmatprep.subr.bf16.mxu0 0
    %1917 = vmatpush1.bf16.msra.mxu0 0
    %1918 = vmatprep.subr.bf16.mxu0 0
    %1919 = vmatpush1.bf16.msra.mxu0 0
    %1920 = vmatprep.subr.bf16.mxu0 0
    %1921 = vmatpush1.bf16.msra.mxu0 0
    %1922 = vmatprep.subr.bf16.mxu0 0
    %1923 = vmatpush1.bf16.msra.mxu0 0
    %1924 = vmatprep.subr.bf16.mxu0 0
    %1925 = vmatpush1.bf16.msra.mxu0 0
    %1926 = vmatprep.subr.bf16.mxu0 0
    %1927 = vmatpush1.bf16.msra.mxu0 0
    %1928 = vmatprep.subr.bf16.mxu0 0
    %1929 = vmatpush1.bf16.msra.mxu0 0
    %1930 = vmatprep.subr.bf16.mxu0 0
    %1931 = vmatpush1.bf16.msra.mxu0 0
    %1932 = vmatprep.subr.bf16.mxu0 0
    %1933 = vmatpush1.bf16.msra.mxu0 0
    %1934 = vmatprep.subr.bf16.mxu0 0
    %1935 = vmatpush1.bf16.msra.mxu0 0
    %1936 = vmatprep.subr.bf16.mxu0 0
    %1937 = vmatpush1.bf16.msra.mxu0 0
    %1938 = vmatprep.subr.bf16.mxu0 0
    %1939 = vmatpush1.bf16.msra.mxu0 0
    %1940 = vmatprep.subr.bf16.mxu0 0
    %1941 = vmatpush1.bf16.msra.mxu0 0
    %1942 = vmatprep.mubr.bf16.mxu0 0
    %1943 = vmatmul.mubr.bf16.gmra.mrb[0].mxu0 %v1742
    %v1944 = vpop.f32.mrb[0].mxu0
    %v1945 = vadd.f32 0.0, %v1944
    %v1946 = vpop.f32.mrb[0].mxu0
    %v1947 = vpop.f32.mrb[0].mxu0
    %v1948 = vpop.f32.mrb[0].mxu0
    %1949 = vdwg.mxu0
    %v1950 = vadd.f32 %v1905, %v1945
    %v1951 = vxor.u32 %v1950, 2147483648
    %v1952 = vmul.f32 %v1951, 1.442695
    %v1953 = vpow.pop %v1952
    %v1954 = vadd.f32 %v1953, 1.0
    %v1955 = vrcp.pop %v1954
    %v1956 = vmul.f32 1.0, %v1955
    %v1957 = vtanh.pop %v1950
    %v1958 = vmul.f32 %v1956, %v1730
    %1960 = vrot.lane.b32.xlu0 %v1957, 64
    %v1961 = vpop.permute.xlu0 %1960
    %v1963 = vmul.f32 %v1956, %v1961
    %1965 = vrot.lane.b32.xlu0 %v1963, 32
    %v1966 = vpop.permute.xlu0 %1965
    %v1968 = vadd.f32 %v1958, %v1966
    %v1969 = vtanh.pop %v1968
    %1971 = vrot.lane.b32.xlu0 %v1969, 64
    %v1972 = vpop.permute.xlu0 %1971
    %v1974 = vmul.f32 %v1956, %v1972
    %v1975 = vpack.c.bf16 %v1974, %v1974
    %1977 = vrot.lane.b32.xlu0 %v1975, 32
    %v1978 = vpop.permute.xlu0 %1977
    %v1980 = vsel %vm216, %v1978, 0
    %1982 = vmatprep.subr.bf16.mxu0 0
    %1983 = vmatpush1.bf16.msra.mxu0 %v303
    %1984 = vmatprep.subr.bf16.mxu0 0
    %1985 = vmatpush1.bf16.msra.mxu0 %v304
    %1986 = vmatprep.subr.bf16.mxu0 0
    %1987 = vmatpush1.bf16.msra.mxu0 0
    %1988 = vmatprep.subr.bf16.mxu0 0
    %1989 = vmatpush1.bf16.msra.mxu0 0
    %1990 = vmatprep.subr.bf16.mxu0 0
    %1991 = vmatpush1.bf16.msra.mxu0 0
    %1992 = vmatprep.subr.bf16.mxu0 0
    %1993 = vmatpush1.bf16.msra.mxu0 0
    %1994 = vmatprep.subr.bf16.mxu0 0
    %1995 = vmatpush1.bf16.msra.mxu0 0
    %1996 = vmatprep.subr.bf16.mxu0 0
    %1997 = vmatpush1.bf16.msra.mxu0 0
    %1998 = vmatprep.subr.bf16.mxu0 0
    %1999 = vmatpush1.bf16.msra.mxu0 0
    %2000 = vmatprep.subr.bf16.mxu0 0
    %2001 = vmatpush1.bf16.msra.mxu0 0
    %2002 = vmatprep.subr.bf16.mxu0 0
    %2003 = vmatpush1.bf16.msra.mxu0 0
    %2004 = vmatprep.subr.bf16.mxu0 0
    %2005 = vmatpush1.bf16.msra.mxu0 0
    %2006 = vmatprep.subr.bf16.mxu0 0
    %2007 = vmatpush1.bf16.msra.mxu0 0
    %2008 = vmatprep.subr.bf16.mxu0 0
    %2009 = vmatpush1.bf16.msra.mxu0 0
    %2010 = vmatprep.subr.bf16.mxu0 0
    %2011 = vmatpush1.bf16.msra.mxu0 0
    %2012 = vmatprep.subr.bf16.mxu0 0
    %2013 = vmatpush1.bf16.msra.mxu0 0
    %2014 = vmatprep.mubr.bf16.mxu0 0
    %2015 = vmatmul.mubr.bf16.gmra.mrb[0].mxu0 %v1980
    %v2016 = vpop.f32.mrb[0].mxu0
    %v2017 = vadd.f32 %v290, %v2016
    %v2018 = vpop.f32.mrb[0].mxu0
    %v2019 = vpop.f32.mrb[0].mxu0
    %v2020 = vpop.f32.mrb[0].mxu0
    %2021 = vdwg.mxu0
    %2023 = vrot.lane.b32.xlu0 %v1855, 32
    %v2024 = vpop.permute.xlu0 %2023
    %v2026 = vsel %vm216, %v2024, 0
    %2028 = vmatprep.subr.bf16.mxu0 0
    %2029 = vmatpush1.bf16.msra.mxu0 %v358
    %2030 = vmatprep.subr.bf16.mxu0 0
    %2031 = vmatpush1.bf16.msra.mxu0 %v359
    %2032 = vmatprep.subr.bf16.mxu0 0
    %2033 = vmatpush1.bf16.msra.mxu0 0
    %2034 = vmatprep.subr.bf16.mxu0 0
    %2035 = vmatpush1.bf16.msra.mxu0 0
    %2036 = vmatprep.subr.bf16.mxu0 0
    %2037 = vmatpush1.bf16.msra.mxu0 0
    %2038 = vmatprep.subr.bf16.mxu0 0
    %2039 = vmatpush1.bf16.msra.mxu0 0
    %2040 = vmatprep.subr.bf16.mxu0 0
    %2041 = vmatpush1.bf16.msra.mxu0 0
    %2042 = vmatprep.subr.bf16.mxu0 0
    %2043 = vmatpush1.bf16.msra.mxu0 0
    %2044 = vmatprep.subr.bf16.mxu0 0
    %2045 = vmatpush1.bf16.msra.mxu0 0
    %2046 = vmatprep.subr.bf16.mxu0 0
    %2047 = vmatpush1.bf16.msra.mxu0 0
    %2048 = vmatprep.subr.bf16.mxu0 0
    %2049 = vmatpush1.bf16.msra.mxu0 0
    %2050 = vmatprep.subr.bf16.mxu0 0
    %2051 = vmatpush1.bf16.msra.mxu0 0
    %2052 = vmatprep.subr.bf16.mxu0 0
    %2053 = vmatpush1.bf16.msra.mxu0 0
    %2054 = vmatprep.subr.bf16.mxu0 0
    %2055 = vmatpush1.bf16.msra.mxu0 0
    %2056 = vmatprep.subr.bf16.mxu0 0
    %2057 = vmatpush1.bf16.msra.mxu0 0
    %2058 = vmatprep.subr.bf16.mxu0 0
    %2059 = vmatpush1.bf16.msra.mxu0 0
    %2060 = vmatprep.mubr.bf16.mxu0 0
    %2061 = vmatmul.mubr.bf16.gmra.mrb[0].mxu0 %v2026
    %v2062 = vpop.f32.mrb[0].mxu0
    %v2063 = vadd.f32 0.0, %v2062
    %v2064 = vpop.f32.mrb[0].mxu0
    %v2065 = vpop.f32.mrb[0].mxu0
    %v2066 = vpop.f32.mrb[0].mxu0
    %2067 = vdwg.mxu0
    %v2068 = vadd.f32 %v2017, %v2063
    %v2069 = vxor.u32 %v2068, 2147483648
    %v2070 = vmul.f32 %v2069, 1.442695
    %v2071 = vpow.pop %v2070
    %v2072 = vadd.f32 %v2071, 1.0
    %v2073 = vrcp.pop %v2072
    %v2074 = vmul.f32 1.0, %v2073
    %v2075 = vtanh.pop %v2068
    %v2076 = vmul.f32 %v2074, %v1848
    %2078 = vrot.lane.b32.xlu0 %v2075, 64
    %v2079 = vpop.permute.xlu0 %2078
    %v2081 = vmul.f32 %v2074, %v2079
    %2083 = vrot.lane.b32.xlu0 %v2081, 32
    %v2084 = vpop.permute.xlu0 %2083
    %v2086 = vadd.f32 %v2076, %v2084
    %v2087 = vtanh.pop %v2086
    %2089 = vrot.lane.b32.xlu0 %v2087, 64
    %v2090 = vpop.permute.xlu0 %2089
    %v2092 = vmul.f32 %v2074, %v2090
    %v2093 = vpack.c.bf16 %v2092, %v2092
    %v2094 = vld [vmem:[#allocation9] sm:$0xf]
    %v2095 = vld [vmem:[#allocation9 + $0x4] sm:$0xf]
    %v2096 = vld [vmem:[#allocation9 + $0x8] sm:$0xf]
    %v2097 = vld [vmem:[#allocation9 + $0xc] sm:$0xf]
    %v2098 = vld [vmem:[#allocation10] sm:$0x1]
    %v2100 = vlaneseq
    %v2101 = vshrl.u32 %v2100, 7
    %v2102 = vsub.s32 0, %v2101
    %v2103 = vrot.slane %v2098, %v2102
    %2106 = vrot.lane.b32.xlu0 %v2093, 32
    %v2107 = vpop.permute.xlu0 %2106
    %v2112 = vunpack.c.l.b16 %v2094
    %v2113 = vunpack.c.l.b16 %v2095
    %v2114 = vunpack.c.l.b16 %v2096
    %v2115 = vunpack.c.l.b16 %v2097
    %v2116 = vpack.c.b16 %v2113, %v2112
    %v2117 = vpack.c.b16 %v2115, %v2114
    %v2121 = vsel %vm216, %v2107, 0
    %2123 = vmatprep.subr.bf16.mxu0 0
    %2124 = vmatpush1.bf16.msra.mxu0 %v2116
    %2125 = vmatprep.subr.bf16.mxu0 0
    %2126 = vmatpush1.bf16.msra.mxu0 %v2117
    %2127 = vmatprep.subr.bf16.mxu0 0
    %2128 = vmatpush1.bf16.msra.mxu0 0
    %2129 = vmatprep.subr.bf16.mxu0 0
    %2130 = vmatpush1.bf16.msra.mxu0 0
    %2131 = vmatprep.subr.bf16.mxu0 0
    %2132 = vmatpush1.bf16.msra.mxu0 0
    %2133 = vmatprep.subr.bf16.mxu0 0
    %2134 = vmatpush1.bf16.msra.mxu0 0
    %2135 = vmatprep.subr.bf16.mxu0 0
    %2136 = vmatpush1.bf16.msra.mxu0 0
    %2137 = vmatprep.subr.bf16.mxu0 0
    %2138 = vmatpush1.bf16.msra.mxu0 0
    %2139 = vmatprep.subr.bf16.mxu0 0
    %2140 = vmatpush1.bf16.msra.mxu0 0
    %2141 = vmatprep.subr.bf16.mxu0 0
    %2142 = vmatpush1.bf16.msra.mxu0 0
    %2143 = vmatprep.subr.bf16.mxu0 0
    %2144 = vmatpush1.bf16.msra.mxu0 0
    %2145 = vmatprep.subr.bf16.mxu0 0
    %2146 = vmatpush1.bf16.msra.mxu0 0
    %2147 = vmatprep.subr.bf16.mxu0 0
    %2148 = vmatpush1.bf16.msra.mxu0 0
    %2149 = vmatprep.subr.bf16.mxu0 0
    %2150 = vmatpush1.bf16.msra.mxu0 0
    %2151 = vmatprep.subr.bf16.mxu0 0
    %2152 = vmatpush1.bf16.msra.mxu0 0
    %2153 = vmatprep.subr.bf16.mxu0 0
    %2154 = vmatpush1.bf16.msra.mxu0 0
    %2155 = vmatprep.mubr.bf16.mxu0 0
    %2156 = vmatmul.mubr.bf16.gmra.mrb[0].mxu0 %v2121
    %v2157 = vpop.f32.mrb[0].mxu0
    %v2158 = vadd.f32 %v2103, %v2157
    %v2159 = vpop.f32.mrb[0].mxu0
    %v2160 = vpop.f32.mrb[0].mxu0
    %v2161 = vpop.f32.mrb[0].mxu0
    %2162 = vdwg.mxu0
    %2163 = vst [vmem:[#allocation12] sm:$0x3] %v2158
    // Predicated region
    $region58: #{next_syllable_lstm_forward.1} parent=1 // pred_check
      _
    $region59: #{next_syllable_lstm_forward.1} parent=1 // pred_check_branch
      %2165 = sbr.rel (0) target = $region61
    $region60: #{next_syllable_lstm_forward.1} parent=1 // pred_region
      %s2167 = ssub.s32 32, 32
      %2168 = vsyncadd [#allocation4], %s2167
      %s2170 = sshll.u32 [#allocation12], 4
      %s2171 = int_to_ptr.vmem [resolvable:$true] %s2170
      %2173 = dma.vmem_to_hbm [thread:$0]  %s2171, 32, %s9, [#allocation4]
    $region61: #{next_syllable_lstm_forward.1} parent=1 // pred_fallthru
      _
    // Predicated region
    $region62: #{next_syllable_lstm_forward.1} parent=1 // pred_check
      _
    $region63: #{next_syllable_lstm_forward.1} parent=1 // pred_check_branch
      %2175 = sbr.rel (0) target = $region65
    $region64: #{next_syllable_lstm_forward.1} parent=1 // pred_region
      %2176 = dma.done [#allocation4], 32
    $region65: #{next_syllable_lstm_forward.1} parent=1 // pred_fallthru
      _
    %2177 = vsyncpa [#allocation3], 1
    %2178 = vsyncpa [#allocation8], 1
    %2179 = vsyncpa [#allocation11], 1
    %2180 = vsyncpa [#allocation4], 1
    %2181 = vsyncpa [#allocation5], 1

</llo_original>
